<compile_context>
chip_gen: v7x
topology: tpu7x:2x2x1
jax: 0.10.0
libtpu: 0.0.40
codegen_flags: <defaults>
</compile_context>

<pallas_src>
import functools

import jax
import jax.numpy as jnp
from jax.experimental import pallas as pl
from jax.experimental.pallas import tpu as pltpu


def _attentionwalk_kernel(probs_ref,                  # SMEM, (W,) scaled probs
                          tgt_ref, adj_ref, left_ref, right_ref,
                          out_ref, acc_ref,
                          *, window_size, fold_rows):
    j = pl.program_id(1)

    @pl.when(j == 0)
    def _():
        acc_ref[...] = jnp.zeros_like(acc_ref)

    # Attention-weighted window sum for this (tm, tn) tile.  probs were
    # pre-scaled by num_of_walks * N in the wrapper, so this already equals the
    # "num_of_walks * shape[0] * weighted_tar_mat" term of the reference.
    # Narrow-dtype tiles are cast to f32 per tile (cheap VPU cast; halves the
    # HBM stream relative to f32 inputs, and keeps v5e off bf16 VALU paths).
    wtm = probs_ref[0] * tgt_ref[0].astype(jnp.float32)
    for w in range(1, window_size):                     # tiny static unroll
        wtm = wtm + probs_ref[w] * tgt_ref[w].astype(jnp.float32)

    # Factorization estimate for this tile (MXU, K = half_dim).
    est = jnp.dot(left_ref[...], right_ref[...],
                  preferred_element_type=jnp.float32)   # (tm, tn)

    # -log(sigmoid(est)) = softplus(-est); -log(1 - sigmoid(est)) = softplus(est)
    # softplus(-x) = max(-x, 0) + log(1 + exp(-|x|)); softplus(x) = softplus(-x) + x
    log_term = jnp.log(1.0 + jnp.exp(-jnp.abs(est)))
    sp_neg = jnp.maximum(-est, 0.0) + log_term          # softplus(-est)
    sp_pos = sp_neg + est                               # softplus(+est)

    loss = jnp.abs(wtm * sp_neg
                   + adj_ref[...].astype(jnp.float32) * sp_pos)   # (tm, tn)

    # Fold the tm rows into an (8, tn) partial with a balanced reshape+sum
    # (tree of vreg adds); defer the cross-lane reduce to the last column step.
    if fold_rows:
        part = loss.reshape(-1, 8, loss.shape[-1]).sum(axis=0)
    else:
        part = loss
    acc_ref[...] += part

    @pl.when(j == pl.num_programs(1) - 1)
    def _():
        total = jnp.sum(acc_ref[...])                    # once per row tile
        out_ref[...] = jnp.full(out_ref.shape, total, jnp.float32)


def _largest_tile(n, max_tile, quantum):
    """Largest t <= max_tile that divides n and is a multiple of quantum, else n."""
    if n <= max_tile:
        return n
    t = (max_tile // quantum) * quantum
    while t >= quantum:
        if n % t == 0:
            return t
        t -= quantum
    return n                                            # full-extent fallback


def attention_walk_loss(attention, weighted_target_tensor, adjacency_opposite,
                        left_factors, right_factors, *,
                        num_of_walks, beta, gamma, tm=None, tn=None):
    W, n, _ = weighted_target_tensor.shape
    half_dim = left_factors.shape[1]

    # Generation-aware VMEM budget: v7x has 64 MiB physical VMEM per TC,
    # v5e/v6e have 128 MiB.  Keep the biggest tile that comfortably fits.
    try:
        phys_vmem = int(getattr(pltpu.get_tpu_info(), "vmem_capacity_bytes",
                                64 * 1024 * 1024))
    except Exception:  # query unavailable -> conservative (v7x-safe) budget
        phys_vmem = 64 * 1024 * 1024
    if phys_vmem <= 64 * 1024 * 1024:
        vmem_limit = 48 * 1024 * 1024
        max_tn = 2048
    else:
        vmem_limit = 96 * 1024 * 1024
        max_tn = 4096

    if tm is None:
        tm = _largest_tile(n, 128, 16)      # multiple of 16 for bf16 tiles
    if tn is None:
        tn = _largest_tile(n, max_tn, 128)  # lane axis, keep DMA contiguous
    # TODO(synk): no masked/ragged-tile path; awkward N falls back to a
    # full-extent dimension (correct, but may be VMEM-heavy for huge N).
    assert n % tm == 0 and n % tn == 0

    attention = attention.astype(jnp.float32)
    probs = jax.nn.softmax(attention.reshape(-1))                  # (W,)
    scaled_probs = probs * float(num_of_walks * n)                 # fold scale

    left_factors32 = left_factors.astype(jnp.float32)    # tiny arrays
    right_factors32 = right_factors.astype(jnp.float32)

    n_i, n_j = n // tm, n // tn
    fold_rows = (tm % 8 == 0) and (tm > 8)
    acc_rows = 8 if (tm % 8 == 0) else tm

    tgt_bytes = weighted_target_tensor.size * weighted_target_tensor.dtype.itemsize
    adj_bytes = adjacency_opposite.size * adjacency_opposite.dtype.itemsize
    cost = pl.CostEstimate(
        flops=int(2 * n * n * (half_dim + W)),
        transcendentals=int(2 * n * n),
        bytes_accessed=int(tgt_bytes + adj_bytes
                           + left_factors32.size * 4 * n_j
                           + right_factors32.size * 4 * n_i
                           + n_i * 8 * 128 * 4),
    )

    kernel = functools.partial(_attentionwalk_kernel,
                               window_size=W, fold_rows=fold_rows)

    # TODO(synk): on v7x, verify with xprof that the "parallel" row axis is
    # sharded across both TensorCores; if not, switch it to CORE_PARALLEL.
    partials = pl.pallas_call(
        kernel,
        out_shape=jax.ShapeDtypeStruct((n_i, 8, 128), jnp.float32),
        grid_spec=pltpu.PrefetchScalarGridSpec(
            num_scalar_prefetch=1,                       # scaled_probs -> SMEM
            grid=(n_i, n_j),
            in_specs=[
                pl.BlockSpec((W, tm, tn), lambda i, j, p: (0, i, j)),   # target
                pl.BlockSpec((tm, tn), lambda i, j, p: (i, j)),         # adj_opp
                pl.BlockSpec((tm, half_dim), lambda i, j, p: (i, 0)),   # left
                pl.BlockSpec((half_dim, tn), lambda i, j, p: (0, j)),   # right
            ],
            out_specs=pl.BlockSpec((1, 8, 128), lambda i, j, p: (i, 0, 0)),
            scratch_shapes=[pltpu.VMEM((acc_rows, tn), jnp.float32)],
        ),
        compiler_params=pltpu.CompilerParams(
            dimension_semantics=("parallel", "arbitrary"),
            vmem_limit_bytes=vmem_limit),
        cost_estimate=cost,
    )(scaled_probs,
      weighted_target_tensor,        # caller dtype (bf16 ok) -> cast in-kernel
      adjacency_opposite,            # caller dtype (bf16/int ok) -> cast in-kernel
      left_factors32,
      right_factors32)

    # Finalize on the host side of the kernel (tiny arrays).
    total_abs_loss = jnp.sum(partials[:, 0, 0])
    average_loss_on_mat = total_abs_loss / float(n * n)
    norms = (jnp.mean(jnp.abs(left_factors32))
             + jnp.mean(jnp.abs(right_factors32)))
    loss_on_regularization = beta * jnp.sum(attention * attention)
    return average_loss_on_mat + loss_on_regularization + gamma * norms


def reference_loss(attention, tgt, adj, left, right,
                   num_of_walks, beta, gamma):
    """Pure-JAX port of AttentionWalkLayer.forward (for validation)."""
    probs = jax.nn.softmax(attention, axis=0)                  # (W, 1)
    wtm = jnp.sum(tgt * probs[:, :, None], axis=0)             # (N, N)
    est = left @ right
    sig = jax.nn.sigmoid(est)
    loss_on_target = -wtm * jnp.log(sig)
    loss_opposite = -adj * jnp.log(1.0 - sig)
    loss_on_mat = num_of_walks * wtm.shape[0] * loss_on_target + loss_opposite
    average_loss_on_mat = jnp.mean(jnp.abs(loss_on_mat))
    norms = jnp.mean(jnp.abs(left)) + jnp.mean(jnp.abs(right))
    loss_on_regularization = beta * jnp.sum(attention ** 2)
    return average_loss_on_mat + loss_on_regularization + gamma * norms


if __name__ == "__main__":
    # Small shapes consistent with the module:
    #   shapes = (window_size, N, N), dimensions = 32 -> half_dim = 16
    W, N, D = 8, 256, 32
    half_dim = D // 2
    num_of_walks, beta, gamma = 5, 0.5, 0.5

    key = jax.random.PRNGKey(0)
    k1, k2, k3, k4, k5 = jax.random.split(key, 5)
    # Parameters: deterministic uniform(-0.01, 0.01) as in initialize_weights()
    attention = jax.random.uniform(k1, (W, 1), jnp.float32, -0.01, 0.01)
    left_factors = jax.random.uniform(k2, (N, half_dim), jnp.float32, -0.01, 0.01)
    right_factors = jax.random.uniform(k3, (half_dim, N), jnp.float32, -0.01, 0.01)
    # Forward inputs: feed the dominant (W, N, N) stream and the 0/1 adjacency
    # in bf16 -- the kernel casts per-tile, halving HBM traffic vs f32.
    weighted_target_tensor = jax.random.uniform(
        k4, (W, N, N), jnp.float32, 0.0, 3.0).astype(jnp.bfloat16)
    adjacency_opposite = (jax.random.uniform(k5, (N, N), jnp.float32) > 0.7
                          ).astype(jnp.bfloat16)

    loss = attention_walk_loss(
        attention, weighted_target_tensor, adjacency_opposite,
        left_factors, right_factors,
        num_of_walks=num_of_walks, beta=beta, gamma=gamma)
    loss = jax.block_until_ready(loss)

    ref = reference_loss(attention,
                         weighted_target_tensor.astype(jnp.float32),
                         adjacency_opposite.astype(jnp.float32),
                         left_factors, right_factors,
                         num_of_walks, beta, gamma)
    assert jnp.allclose(loss, ref, rtol=1e-3, atol=1e-4), (float(loss), float(ref))
    print("KERNEL_OK")
</pallas_src>

<mosaic_0001>
module attributes {stable_mosaic.version = 11 : i64} {
  func.func @_attentionwalk_kernel(%arg0: i32, %arg1: i32, %arg2: memref<8xf32, #tpu.memory_space<smem>>, %arg3: memref<8x128x256xbf16, #tpu.memory_space<vmem>>, %arg4: memref<128x256xbf16, #tpu.memory_space<vmem>>, %arg5: memref<128x16xf32, #tpu.memory_space<vmem>>, %arg6: memref<16x256xf32, #tpu.memory_space<vmem>>, %arg7: memref<1x8x128xf32, #tpu.memory_space<vmem>>, %arg8: memref<8x256xf32, #tpu.memory_space<vmem>>) attributes {dimension_semantics = [#tpu.dimension_semantics<parallel>, #tpu.dimension_semantics<arbitrary>], iteration_bounds = array<i64: 2, 1>, scalar_prefetch = 1 : i64, scratch_operands = 1 : i64, tpu.core_type = #tpu.core_type<tc>, window_params = [{transform_indices = @transform_0, window_bounds = array<i64: 8, 128, 256>}, {transform_indices = @transform_1, window_bounds = array<i64: 128, 256>}, {transform_indices = @transform_2, window_bounds = array<i64: 128, 16>}, {transform_indices = @transform_3, window_bounds = array<i64: 16, 256>}, {transform_indices = @transform_4, window_bounds = array<i64: 1, 8, 128>}]} {
    %c0_i32 = arith.constant 0 : i32
    %0 = arith.cmpi eq, %arg1, %c0_i32 : i32
    %1 = arith.extui %0 : i1 to i32
    %c0_i32_0 = arith.constant 0 : i32
    %2 = arith.cmpi ne, %1, %c0_i32_0 : i32
    scf.if %2 {
      %cst_42 = arith.constant 0.000000e+00 : f32
      %88 = vector.broadcast %cst_42 : f32 to vector<8x256xf32>
      %c0_43 = arith.constant 0 : index
      %c0_44 = arith.constant 0 : index
      %89 = vector.load %arg8[%c0_43, %c0_44] : memref<8x256xf32, #tpu.memory_space<vmem>>, vector<8x256xf32>
      tpu.vector_store %arg8[%c0_43, %c0_44], %88 {strides = array<i32>} : memref<8x256xf32, #tpu.memory_space<vmem>>, vector<8x256xf32>,
    } else {
    }
    %c0 = arith.constant 0 : index
    %3 = memref.load %arg2[%c0] : memref<8xf32, #tpu.memory_space<smem>>
    %c0_1 = arith.constant 0 : index
    %c0_2 = arith.constant 0 : index
    %c0_3 = arith.constant 0 : index
    %4 = vector.load %arg3[%c0_1, %c0_2, %c0_3] : memref<8x128x256xbf16, #tpu.memory_space<vmem>>, vector<1x128x256xbf16>
    %5 = vector.shape_cast %4 : vector<1x128x256xbf16> to vector<128x256xbf16>
    %6 = arith.extf %5 : vector<128x256xbf16> to vector<128x256xf32>
    %7 = vector.broadcast %3 : f32 to vector<128x256xf32>
    %8 = arith.mulf %7, %6 : vector<128x256xf32>
    %c1 = arith.constant 1 : index
    %9 = memref.load %arg2[%c1] : memref<8xf32, #tpu.memory_space<smem>>
    %c1_4 = arith.constant 1 : index
    %c0_5 = arith.constant 0 : index
    %c0_6 = arith.constant 0 : index
    %10 = vector.load %arg3[%c1_4, %c0_5, %c0_6] : memref<8x128x256xbf16, #tpu.memory_space<vmem>>, vector<1x128x256xbf16>
    %11 = vector.shape_cast %10 : vector<1x128x256xbf16> to vector<128x256xbf16>
    %12 = arith.extf %11 : vector<128x256xbf16> to vector<128x256xf32>
    %13 = vector.broadcast %9 : f32 to vector<128x256xf32>
    %14 = arith.mulf %13, %12 : vector<128x256xf32>
    %15 = arith.addf %8, %14 : vector<128x256xf32>
    %c2 = arith.constant 2 : index
    %16 = memref.load %arg2[%c2] : memref<8xf32, #tpu.memory_space<smem>>
    %c2_7 = arith.constant 2 : index
    %c0_8 = arith.constant 0 : index
    %c0_9 = arith.constant 0 : index
    %17 = vector.load %arg3[%c2_7, %c0_8, %c0_9] : memref<8x128x256xbf16, #tpu.memory_space<vmem>>, vector<1x128x256xbf16>
    %18 = vector.shape_cast %17 : vector<1x128x256xbf16> to vector<128x256xbf16>
    %19 = arith.extf %18 : vector<128x256xbf16> to vector<128x256xf32>
    %20 = vector.broadcast %16 : f32 to vector<128x256xf32>
    %21 = arith.mulf %20, %19 : vector<128x256xf32>
    %22 = arith.addf %15, %21 : vector<128x256xf32>
    %c3 = arith.constant 3 : index
    %23 = memref.load %arg2[%c3] : memref<8xf32, #tpu.memory_space<smem>>
    %c3_10 = arith.constant 3 : index
    %c0_11 = arith.constant 0 : index
    %c0_12 = arith.constant 0 : index
    %24 = vector.load %arg3[%c3_10, %c0_11, %c0_12] : memref<8x128x256xbf16, #tpu.memory_space<vmem>>, vector<1x128x256xbf16>
    %25 = vector.shape_cast %24 : vector<1x128x256xbf16> to vector<128x256xbf16>
    %26 = arith.extf %25 : vector<128x256xbf16> to vector<128x256xf32>
    %27 = vector.broadcast %23 : f32 to vector<128x256xf32>
    %28 = arith.mulf %27, %26 : vector<128x256xf32>
    %29 = arith.addf %22, %28 : vector<128x256xf32>
    %c4 = arith.constant 4 : index
    %30 = memref.load %arg2[%c4] : memref<8xf32, #tpu.memory_space<smem>>
    %c4_13 = arith.constant 4 : index
    %c0_14 = arith.constant 0 : index
    %c0_15 = arith.constant 0 : index
    %31 = vector.load %arg3[%c4_13, %c0_14, %c0_15] : memref<8x128x256xbf16, #tpu.memory_space<vmem>>, vector<1x128x256xbf16>
    %32 = vector.shape_cast %31 : vector<1x128x256xbf16> to vector<128x256xbf16>
    %33 = arith.extf %32 : vector<128x256xbf16> to vector<128x256xf32>
    %34 = vector.broadcast %30 : f32 to vector<128x256xf32>
    %35 = arith.mulf %34, %33 : vector<128x256xf32>
    %36 = arith.addf %29, %35 : vector<128x256xf32>
    %c5 = arith.constant 5 : index
    %37 = memref.load %arg2[%c5] : memref<8xf32, #tpu.memory_space<smem>>
    %c5_16 = arith.constant 5 : index
    %c0_17 = arith.constant 0 : index
    %c0_18 = arith.constant 0 : index
    %38 = vector.load %arg3[%c5_16, %c0_17, %c0_18] : memref<8x128x256xbf16, #tpu.memory_space<vmem>>, vector<1x128x256xbf16>
    %39 = vector.shape_cast %38 : vector<1x128x256xbf16> to vector<128x256xbf16>
    %40 = arith.extf %39 : vector<128x256xbf16> to vector<128x256xf32>
    %41 = vector.broadcast %37 : f32 to vector<128x256xf32>
    %42 = arith.mulf %41, %40 : vector<128x256xf32>
    %43 = arith.addf %36, %42 : vector<128x256xf32>
    %c6 = arith.constant 6 : index
    %44 = memref.load %arg2[%c6] : memref<8xf32, #tpu.memory_space<smem>>
    %c6_19 = arith.constant 6 : index
    %c0_20 = arith.constant 0 : index
    %c0_21 = arith.constant 0 : index
    %45 = vector.load %arg3[%c6_19, %c0_20, %c0_21] : memref<8x128x256xbf16, #tpu.memory_space<vmem>>, vector<1x128x256xbf16>
    %46 = vector.shape_cast %45 : vector<1x128x256xbf16> to vector<128x256xbf16>
    %47 = arith.extf %46 : vector<128x256xbf16> to vector<128x256xf32>
    %48 = vector.broadcast %44 : f32 to vector<128x256xf32>
    %49 = arith.mulf %48, %47 : vector<128x256xf32>
    %50 = arith.addf %43, %49 : vector<128x256xf32>
    %c7 = arith.constant 7 : index
    %51 = memref.load %arg2[%c7] : memref<8xf32, #tpu.memory_space<smem>>
    %c7_22 = arith.constant 7 : index
    %c0_23 = arith.constant 0 : index
    %c0_24 = arith.constant 0 : index
    %52 = vector.load %arg3[%c7_22, %c0_23, %c0_24] : memref<8x128x256xbf16, #tpu.memory_space<vmem>>, vector<1x128x256xbf16>
    %53 = vector.shape_cast %52 : vector<1x128x256xbf16> to vector<128x256xbf16>
    %54 = arith.extf %53 : vector<128x256xbf16> to vector<128x256xf32>
    %55 = vector.broadcast %51 : f32 to vector<128x256xf32>
    %56 = arith.mulf %55, %54 : vector<128x256xf32>
    %57 = arith.addf %50, %56 : vector<128x256xf32>
    %c0_25 = arith.constant 0 : index
    %c0_26 = arith.constant 0 : index
    %58 = vector.load %arg5[%c0_25, %c0_26] : memref<128x16xf32, #tpu.memory_space<vmem>>, vector<128x16xf32>
    %c0_27 = arith.constant 0 : index
    %c0_28 = arith.constant 0 : index
    %59 = vector.load %arg6[%c0_27, %c0_28] : memref<16x256xf32, #tpu.memory_space<vmem>>, vector<16x256xf32>
    %cst = arith.constant dense<0.000000e+00> : vector<128x256xf32>
    %60 = tpu.matmul %58, %59, %cst {dimension_numbers = #tpu.dot_dimension_numbers<[1], [0], [0], [1], [0, 0, 1, 1], [], []>} : vector<128x16xf32>, vector<16x256xf32>, vector<128x256xf32> -> vector<128x256xf32>
    %61 = math.absf %60 : vector<128x256xf32>
    %cst_29 = arith.constant 0.000000e+00 : f32
    %62 = vector.broadcast %cst_29 : f32 to vector<128x256xf32>
    %63 = arith.subf %62, %61 : vector<128x256xf32>
    %64 = math.exp %63 : vector<128x256xf32>
    %cst_30 = arith.constant 1.000000e+00 : f32
    %65 = vector.broadcast %cst_30 : f32 to vector<128x256xf32>
    %66 = arith.addf %65, %64 : vector<128x256xf32>
    %67 = math.log %66 : vector<128x256xf32>
    %cst_31 = arith.constant 0.000000e+00 : f32
    %68 = vector.broadcast %cst_31 : f32 to vector<128x256xf32>
    %69 = arith.subf %68, %60 : vector<128x256xf32>
    %cst_32 = arith.constant 0.000000e+00 : f32
    %70 = vector.broadcast %cst_32 : f32 to vector<128x256xf32>
    %71 = arith.maximumf %69, %70 : vector<128x256xf32>
    %72 = arith.addf %71, %67 : vector<128x256xf32>
    %73 = arith.addf %72, %60 : vector<128x256xf32>
    %74 = arith.mulf %57, %72 : vector<128x256xf32>
    %c0_33 = arith.constant 0 : index
    %c0_34 = arith.constant 0 : index
    %75 = vector.load %arg4[%c0_33, %c0_34] : memref<128x256xbf16, #tpu.memory_space<vmem>>, vector<128x256xbf16>
    %76 = arith.extf %75 : vector<128x256xbf16> to vector<128x256xf32>
    %77 = arith.mulf %76, %73 : vector<128x256xf32>
    %78 = arith.addf %74, %77 : vector<128x256xf32>
    %79 = math.absf %78 : vector<128x256xf32>
    %80 = vector.shape_cast %79 : vector<128x256xf32> to vector<16x8x256xf32>
    %cst_35 = arith.constant dense<0.000000e+00> : vector<8x256xf32>
    %81 = vector.multi_reduction <add>, %80, %cst_35 [0] : vector<16x8x256xf32> to vector<8x256xf32>
    %c0_36 = arith.constant 0 : index
    %c0_37 = arith.constant 0 : index
    %82 = vector.load %arg8[%c0_36, %c0_37] : memref<8x256xf32, #tpu.memory_space<vmem>>, vector<8x256xf32>
    %83 = arith.addf %82, %81 : vector<8x256xf32>
    %c0_38 = arith.constant 0 : index
    %c0_39 = arith.constant 0 : index
    %84 = vector.load %arg8[%c0_38, %c0_39] : memref<8x256xf32, #tpu.memory_space<vmem>>, vector<8x256xf32>
    tpu.vector_store %arg8[%c0_38, %c0_39], %83 {strides = array<i32>} : memref<8x256xf32, #tpu.memory_space<vmem>>, vector<8x256xf32>,
    %c0_i32_40 = arith.constant 0 : i32
    %85 = arith.cmpi eq, %arg1, %c0_i32_40 : i32
    %86 = arith.extui %85 : i1 to i32
    %c0_i32_41 = arith.constant 0 : i32
    %87 = arith.cmpi ne, %86, %c0_i32_41 : i32
    scf.if %87 {
      %c0_42 = arith.constant 0 : index
      %c0_43 = arith.constant 0 : index
      %88 = vector.load %arg8[%c0_42, %c0_43] : memref<8x256xf32, #tpu.memory_space<vmem>>, vector<8x256xf32>
      %89 = vector.shape_cast %88 : vector<8x256xf32> to vector<1x8x256xf32>
      %cst_44 = arith.constant dense<0.000000e+00> : vector<1xf32>
      %90 = vector.multi_reduction <add>, %89, %cst_44 [1, 2] : vector<1x8x256xf32> to vector<1xf32>
      %91 = vector.shape_cast %90 : vector<1xf32> to vector<1x1x1xf32>
      %92 = vector.extract %91[0, 0, 0] : f32 from vector<1x1x1xf32>
      %93 = vector.broadcast %92 : f32 to vector<1x8x128xf32>
      %c0_45 = arith.constant 0 : index
      %c0_46 = arith.constant 0 : index
      %c0_47 = arith.constant 0 : index
      %94 = vector.load %arg7[%c0_45, %c0_46, %c0_47] : memref<1x8x128xf32, #tpu.memory_space<vmem>>, vector<1x8x128xf32>
      tpu.vector_store %arg7[%c0_45, %c0_46, %c0_47], %93 {strides = array<i32>} : memref<1x8x128xf32, #tpu.memory_space<vmem>>, vector<1x8x128xf32>,
    } else {
    }
    return
  }
  func.func @transform_0(%arg0: i32, %arg1: i32, %arg2: memref<8xf32, #tpu.memory_space<smem>>) -> (i32, i32, i32) {
    %c0_i32 = arith.constant 0 : i32
    %c0_i32_0 = arith.constant 0 : i32
    return %c0_i32, %arg0, %arg1 : i32, i32, i32
  }
  func.func @transform_1(%arg0: i32, %arg1: i32, %arg2: memref<8xf32, #tpu.memory_space<smem>>) -> (i32, i32) {
    %c0_i32 = arith.constant 0 : i32
    return %arg0, %arg1 : i32, i32
  }
  func.func @transform_2(%arg0: i32, %arg1: i32, %arg2: memref<8xf32, #tpu.memory_space<smem>>) -> (i32, i32) {
    %c0_i32 = arith.constant 0 : i32
    %c0_i32_0 = arith.constant 0 : i32
    return %arg0, %c0_i32 : i32, i32
  }
  func.func @transform_3(%arg0: i32, %arg1: i32, %arg2: memref<8xf32, #tpu.memory_space<smem>>) -> (i32, i32) {
    %c0_i32 = arith.constant 0 : i32
    %c0_i32_0 = arith.constant 0 : i32
    return %c0_i32, %arg1 : i32, i32
  }
  func.func @transform_4(%arg0: i32, %arg1: i32, %arg2: memref<8xf32, #tpu.memory_space<smem>>) -> (i32, i32, i32) {
    %c0_i32 = arith.constant 0 : i32
    %c0_i32_0 = arith.constant 0 : i32
    %c0_i32_1 = arith.constant 0 : i32
    return %arg0, %c0_i32, %c0_i32_0 : i32, i32, i32
  }
}

</mosaic_0001>

<llo_original>
// kernel: tpu_custom_call.1
$region0: #{tpu_custom_call.1}
  #allocation0 [shape = 'u32[]', space=smem, size = 0x4, offset = 0x4, fixed_abs, tag = 'smem constant byte address 0x4 - core index']
  #allocation1 [shape = 'u32[144,128]{1,0:T(1,128)}', space=vmem, size = 0x12000, scoped, tag = 'internal scratch']
  #allocation2 [shape = 'f32[8,256]{1,0:T(8,128)}', space=vmem, size = 0x2000, scoped, tag = 'scratch operand']
  #allocation3 [shape = 's32[1]{0}', space=sflag, size = 0x4, scoped, tag = 'scoped memory for tpu_custom_call.1']
  #allocation4 [shape = 'u8[512]{0}', space=smem, size = 0x200, scoped, tag = 'prefetched SMEM operand 0']
  #allocation9 [shape = 's32[]', space=sflag, size = 0x4, offset = 0, fixed_abs, tag = 'sflag constant byte address 0x0 - dummy sync flag']
  %s0 = inlined_call_operand.vmem [shape: f32[8], index: 0, kind: input, shape index: {}]
  %s1 = inlined_call_operand.hbm [shape: bf16[8,256,256], index: 1, kind: input, shape index: {}]
  %s2 = inlined_call_operand.vmem [shape: bf16[256,256], index: 2, kind: input, shape index: {}]
  %s3 = inlined_call_operand.vmem [shape: f32[256,16], index: 3, kind: input, shape index: {}]
  %s4 = inlined_call_operand.vmem [shape: f32[16,256], index: 4, kind: input, shape index: {}]
  %s5 = inlined_call_operand.hbm [shape: f32[2,8,128], index: 5, kind: output, shape index: {}]
  %s6 = sld [smem:[#allocation0]]
  $region61: #{tpu_custom_call.1} parent=0
    _
  %s8 = ssub.s32 1, %s6
  %s9 = scalar_select 0, %s8, %s6
  %s10 = sshll.u32 %s0, 4
  %s11 = int_to_ptr.vmem [resolvable:$true] %s10
  %13 = dma.vmem_to_smem %s11, 16, [#allocation4], [#allocation3]
  %14 = dma.done [#allocation3], 16
  %15 = sfence
  $region1: #{tpu_custom_call.1} parent=0
    #allocation5 [shape = 'u8[1048576]{0}', space=vmem, size = 0x100000, scoped, tag = 'input window, operand 1']
    #allocation6 [shape = 's32[2]{0}', space=sflag, size = 0x8, scoped, tag = 'scoped memory for tpu_custom_call.1']
    #allocation7 [shape = 's32[2]{0}', space=sflag, size = 0x8, scoped, tag = 'scoped memory for tpu_custom_call.1']
    #allocation8 [shape = 'u8[8192]{0}', space=vmem, size = 0x2000, scoped, tag = 'output window, operand 0']
    %16 = vsyncpa [#allocation6], 0
    %s17 = scalar_lea.sflag [#allocation6], 1
    %18 = vsyncpa %s17, 0
    %19 = vsyncpa [#allocation7], 0
    %s20 = scalar_lea.sflag [#allocation7], 1
    %21 = vsyncpa %s20, 0
    loop: start=0, step=1, limit=4
    $region2: #{tpu_custom_call.1} parent=1 // loop_pre_header
      _
    $region3: #{tpu_custom_call.1} parent=1 // loop_header
      %s23 = sphi 0, %s27
      %p24 = scmp.ge.s32.totalorder %s23, 4
      %s30 = sphi 0, %s42
      %s31 = sphi 0, %s38
      %s32 = sphi 0, %s30
      %s33 = sphi 0, %s31
      %s34 = sphi 0, %s32
      %s35 = sphi 0, %s33
      %s47 = sphi 0, %s49
      %s50 = sphi 0, %s47
      %s51 = sphi 0, %s50
      %s67 = sphi 0, %s51
      %s75 = sphi 0, %s77
      %s78 = sphi 0, %s75
      %s79 = sphi 0, %s78
      %s95 = sphi 0, %s79
      %s101 = sphi 0, %s103
      %s104 = sphi 0, %s101
      %s105 = sphi 0, %s104
      %s121 = sphi 0, %s105
      %s127 = sphi 0, %s129
      %s130 = sphi 0, %s127
      %s131 = sphi 0, %s130
      %s147 = sphi 0, %s131
      %s153 = sphi 0, %s155
      %s156 = sphi 0, %s153
      %s157 = sphi 0, %s156
      %s173 = sphi 0, %s157
    $region4: #{tpu_custom_call.1} parent=1 // loop_header_branch
      %26 = sbr.rel (%p24) target = $region8
    $region5: #{tpu_custom_call.1} parent=1 // loop_body
      %s28 = ssub.s32 %s23, 1
      %s29 = ssub.s32 %s23, 2
      %s36 = sadd.s32 1, %s31
      %p37 = scmp.ge.s32.totalorder %s36, 1
      %s38 = scalar_select %p37, 0, %s36
      %s39 = sadd.s32 1, %s30
      %s40 = scalar_select %p37, %s39, %s30
      %p41 = scmp.ge.s32.totalorder %s40, 2
      %s42 = scalar_select %p41, 0, %s40
      %s43 = ssub.s32 %s30, %s42
      %s44 = ssub.s32 %s31, %s38
      %s45 = sor.u32 %s43, %s44
      %p46 = scmp.eq.s32.totalorder %s45, 0
      %s48 = sadd.s32 %s47, 1
      %s49 = scalar_select %p46, %s47, %s48
      %p52 = pneg %p46
      %p53 = scmp.eq.s32.totalorder %s23, 1
      %p54 = por %p52, %p53
      %p55 = scmp.ne.s32.totalorder %s47, %s50
      %p56 = scmp.eq.s32.totalorder %s23, 0
      %p57 = por %p55, %p56
      %p58 = scmp.ne.s32.totalorder %s47, %s50
      %p59 = scmp.eq.s32.totalorder %s28, 1
      %p60 = por %p58, %p59
      %p61 = scmp.ne.s32.totalorder %s50, %s51
      %p62 = scmp.eq.s32.totalorder %s28, 0
      %p63 = por %p61, %p62
      %p64 = scmp.ne.s32.totalorder %s50, %s51
      %p65 = scmp.eq.s32.totalorder %s29, 1
      %p66 = por %p64, %p65
      %p68 = scmp.ne.s32.totalorder %s51, %s67
      %p69 = scmp.eq.s32.totalorder %s29, 0
      %p70 = por %p68, %p69
      %s71 = ssub.s32 %s30, %s42
      %s72 = ssub.s32 %s31, %s38
      %s73 = sor.u32 %s71, %s72
      %p74 = scmp.eq.s32.totalorder %s73, 0
      %s76 = sadd.s32 %s75, 1
      %s77 = scalar_select %p74, %s75, %s76
      %p80 = pneg %p74
      %p81 = scmp.eq.s32.totalorder %s23, 1
      %p82 = por %p80, %p81
      %p83 = scmp.ne.s32.totalorder %s75, %s78
      %p84 = scmp.eq.s32.totalorder %s23, 0
      %p85 = por %p83, %p84
      %p86 = scmp.ne.s32.totalorder %s75, %s78
      %p87 = scmp.eq.s32.totalorder %s28, 1
      %p88 = por %p86, %p87
      %p89 = scmp.ne.s32.totalorder %s78, %s79
      %p90 = scmp.eq.s32.totalorder %s28, 0
      %p91 = por %p89, %p90
      %p92 = scmp.ne.s32.totalorder %s78, %s79
      %p93 = scmp.eq.s32.totalorder %s29, 1
      %p94 = por %p92, %p93
      %p96 = scmp.ne.s32.totalorder %s79, %s95
      %p97 = scmp.eq.s32.totalorder %s29, 0
      %p98 = por %p96, %p97
      %s99 = ssub.s32 %s30, %s42
      %p100 = scmp.eq.s32.totalorder %s99, 0
      %s102 = sadd.s32 %s101, 1
      %s103 = scalar_select %p100, %s101, %s102
      %p106 = pneg %p100
      %p107 = scmp.eq.s32.totalorder %s23, 1
      %p108 = por %p106, %p107
      %p109 = scmp.ne.s32.totalorder %s101, %s104
      %p110 = scmp.eq.s32.totalorder %s23, 0
      %p111 = por %p109, %p110
      %p112 = scmp.ne.s32.totalorder %s101, %s104
      %p113 = scmp.eq.s32.totalorder %s28, 1
      %p114 = por %p112, %p113
      %p115 = scmp.ne.s32.totalorder %s104, %s105
      %p116 = scmp.eq.s32.totalorder %s28, 0
      %p117 = por %p115, %p116
      %p118 = scmp.ne.s32.totalorder %s104, %s105
      %p119 = scmp.eq.s32.totalorder %s29, 1
      %p120 = por %p118, %p119
      %p122 = scmp.ne.s32.totalorder %s105, %s121
      %p123 = scmp.eq.s32.totalorder %s29, 0
      %p124 = por %p122, %p123
      %s125 = ssub.s32 %s31, %s38
      %p126 = scmp.eq.s32.totalorder %s125, 0
      %s128 = sadd.s32 %s127, 1
      %s129 = scalar_select %p126, %s127, %s128
      %p132 = pneg %p126
      %p133 = scmp.eq.s32.totalorder %s23, 1
      %p134 = por %p132, %p133
      %p135 = scmp.ne.s32.totalorder %s127, %s130
      %p136 = scmp.eq.s32.totalorder %s23, 0
      %p137 = por %p135, %p136
      %p138 = scmp.ne.s32.totalorder %s127, %s130
      %p139 = scmp.eq.s32.totalorder %s28, 1
      %p140 = por %p138, %p139
      %p141 = scmp.ne.s32.totalorder %s130, %s131
      %p142 = scmp.eq.s32.totalorder %s28, 0
      %p143 = por %p141, %p142
      %p144 = scmp.ne.s32.totalorder %s130, %s131
      %p145 = scmp.eq.s32.totalorder %s29, 1
      %p146 = por %p144, %p145
      %p148 = scmp.ne.s32.totalorder %s131, %s147
      %p149 = scmp.eq.s32.totalorder %s29, 0
      %p150 = por %p148, %p149
      %s151 = ssub.s32 %s30, %s42
      %p152 = scmp.eq.s32.totalorder %s151, 0
      %s154 = sadd.s32 %s153, 1
      %s155 = scalar_select %p152, %s153, %s154
      %p158 = pneg %p152
      %p159 = scmp.eq.s32.totalorder %s23, 1
      %p160 = por %p158, %p159
      %p161 = scmp.ne.s32.totalorder %s153, %s156
      %p162 = scmp.eq.s32.totalorder %s23, 0
      %p163 = por %p161, %p162
      %p164 = scmp.ne.s32.totalorder %s153, %s156
      %p165 = scmp.eq.s32.totalorder %s28, 1
      %p166 = por %p164, %p165
      %p167 = scmp.ne.s32.totalorder %s156, %s157
      %p168 = scmp.eq.s32.totalorder %s28, 0
      %p169 = por %p167, %p168
      %p170 = scmp.ne.s32.totalorder %s156, %s157
      %p171 = scmp.eq.s32.totalorder %s29, 1
      %p172 = por %p170, %p171
      %p174 = scmp.ne.s32.totalorder %s157, %s173
      %p175 = scmp.eq.s32.totalorder %s29, 0
      %p176 = por %p174, %p175
      %p177 = scmp.le.s32.totalorder 1, %s23
      %p178 = scmp.lt.s32.totalorder %s23, 3
      %p179 = pnand %p177, %p178
      %p180 = pneg %p179
      // Predicated region
      $region9: #{tpu_custom_call.1} parent=5 // pred_check
        _
      $region10: #{tpu_custom_call.1} parent=5 // pred_check_branch
        %182 = sbr.rel (%p179) target = $region12
      $region11: #{tpu_custom_call.1} parent=5 // pred_region
        %s183 = ssub.s32 %s23, 1
        // Predicated region
        $region13: #{tpu_custom_call.1} parent=11 // pred_check
          %p184 = pneg %p143
        $region14: #{tpu_custom_call.1} parent=11 // pred_check_branch
          %186 = sbr.rel (%p184) target = $region16
        $region15: #{tpu_custom_call.1} parent=11 // pred_region
          %s187 = smul.u32 2, %s33
          %p188 = scmp.lt.s32.totalorder %s187, 1
          %s189 = scalar_select %p188, %s187, 1
          %s190 = smul.addr %s189, 8
          %s191 = scalar_lea.vmem %s4, %s190
          %s192 = smul.u32 2, %s33
        $region16: #{tpu_custom_call.1} parent=11 // pred_fallthru
          _
      $region12: #{tpu_custom_call.1} parent=5 // pred_fallthru
        _
      %p193 = scmp.lt.s32.totalorder %s23, 2
      // Predicated region
      $region17: #{tpu_custom_call.1} parent=5 // pred_check
        %p194 = pneg %p193
      $region18: #{tpu_custom_call.1} parent=5 // pred_check_branch
        %196 = sbr.rel (%p194) target = $region20
      $region19: #{tpu_custom_call.1} parent=5 // pred_region
        // Predicated region
        $region21: #{tpu_custom_call.1} parent=19 // pred_check
          %p197 = pneg %p57
        $region22: #{tpu_custom_call.1} parent=19 // pred_check_branch
          %199 = sbr.rel (%p197) target = $region24
        $region23: #{tpu_custom_call.1} parent=19 // pred_region
          #allocation10 [shape = 'u32[6]{0}', space=smem, size = 0x18, scoped, tag = 'DMA stride descriptor']
          %s200 = sand.u32 %s47, 1
          %s201 = scalar_lea.sflag [#allocation6], %s200
          %s202 = sand.u32 %s47, 1
          %s203 = smul.addr %s202, 1024
          %s204 = scalar_lea.vmem [#allocation5], %s203
          %s205 = smul.u32 16, %s30
          %s206 = smul.u32 2, %s31
          %s208 = ssub.s32 16384, 16384
          %209 = vsyncadd %s201, %s208
          %s210 = smul.addr %s205, 2
          %s211 = sadd.s32 %s206, %s210
          %s212 = smul.addr %s211, 64
          %s213 = scalar_lea.hbm %s1, %s212
          %s215 = sshll.u32 1, 14
          %s216 = sxor.u32 4294967295, %s215
          %s218 = sld [smem:[#allocation0]]
          %s219 = sadd.s32 2, %s218
          %s221 = sshll.u32 7, 26
          %s222 = sxor.u32 4294967295, %s221
          %s223 = sand.u32 0, %s222
          %s224 = sshll.u32 %s219, 26
          %s225 = sor.u32 %s223, %s224
          %s226 = sshll.u32 %s204, 4
          %s227 = int_to_ptr.vmem [resolvable:$true] %s226
          %233 = sst [smem:[#allocation10]] 4096
          %s234 = scalar_lea.smem [#allocation10], 1
          %235 = sst [smem:[%s234]] 2048
          %s236 = scalar_lea.smem [#allocation10], 2
          %237 = sst [smem:[%s236]] 16
          %s238 = scalar_lea.smem [#allocation10], 3
          %239 = sst [smem:[%s238]] 128
          %s240 = scalar_lea.smem [#allocation10], 4
          %241 = sst [smem:[%s240]] 128
          %s242 = scalar_lea.smem [#allocation10], 5
          %243 = sst [smem:[%s242]] 8
          %245 = dma.general %s213, 16384, %s227, %s201, [#allocation9], [#allocation10], %s225, 0
        $region24: #{tpu_custom_call.1} parent=19 // pred_fallthru
          _
        // Predicated region
        $region25: #{tpu_custom_call.1} parent=19 // pred_check
          %p246 = pneg %p85
        $region26: #{tpu_custom_call.1} parent=19 // pred_check_branch
          %248 = sbr.rel (%p246) target = $region28
        $region27: #{tpu_custom_call.1} parent=19 // pred_region
          %s249 = smul.u32 16, %s30
          %s250 = smul.u32 2, %s31
          %p251 = scmp.lt.s32.totalorder %s249, 31
          %s252 = scalar_select %p251, %s249, 31
          %p253 = scmp.lt.s32.totalorder %s250, 1
          %s254 = scalar_select %p253, %s250, 1
          %s255 = smul.addr %s252, 2
          %s256 = sadd.s32 %s254, %s255
          %s257 = smul.addr %s256, 4
          %s258 = scalar_lea.vmem %s2, %s257
          %s259 = smul.u32 16, %s30
          %s260 = smul.u32 2, %s31
        $region28: #{tpu_custom_call.1} parent=19 // pred_fallthru
          _
        // Predicated region
        $region29: #{tpu_custom_call.1} parent=19 // pred_check
          %p261 = pneg %p111
        $region30: #{tpu_custom_call.1} parent=19 // pred_check_branch
          %263 = sbr.rel (%p261) target = $region32
        $region31: #{tpu_custom_call.1} parent=19 // pred_region
          %s264 = smul.u32 16, %s30
          %p265 = scmp.lt.s32.totalorder %s264, 31
          %s266 = scalar_select %p265, %s264, 31
          %s267 = smul.addr %s266, 8
          %s268 = scalar_lea.vmem %s3, %s267
          %s269 = smul.u32 16, %s30
        $region32: #{tpu_custom_call.1} parent=19 // pred_fallthru
          _
      $region20: #{tpu_custom_call.1} parent=5 // pred_fallthru
        _
      %p270 = scmp.le.s32.totalorder 1, %s23
      %p271 = scmp.lt.s32.totalorder %s23, 3
      %p272 = pnand %p270, %p271
      %p273 = pneg %p272
      // Predicated region
      $region33: #{tpu_custom_call.1} parent=5 // pred_check
        _
      $region34: #{tpu_custom_call.1} parent=5 // pred_check_branch
        %275 = sbr.rel (%p272) target = $region36
      $region35: #{tpu_custom_call.1} parent=5 // pred_region
        %s276 = ssub.s32 %s23, 1
        %s277 = sand.u32 %s50, 1
        %s278 = scalar_lea.sflag [#allocation6], %s277
        %s279 = sand.u32 %s50, 1
        %s280 = smul.addr %s279, 1024
        %s281 = scalar_lea.vmem [#allocation5], %s280
        // Predicated region
        $region37: #{tpu_custom_call.1} parent=35 // pred_check
          %p282 = pneg %p63
        $region38: #{tpu_custom_call.1} parent=35 // pred_check_branch
          %284 = sbr.rel (%p282) target = $region40
        $region39: #{tpu_custom_call.1} parent=35 // pred_region
          %285 = dma.done %s278, 16384
        $region40: #{tpu_custom_call.1} parent=35 // pred_fallthru
          _
        %s286 = sand.u32 %s50, 1
        %s287 = scalar_lea.sflag [#allocation6], %s286
        %s288 = sand.u32 %s50, 1
        %s289 = smul.addr %s288, 1024
        %s290 = scalar_lea.vmem [#allocation5], %s289
        %p291 = pneg %p63
        %p292 = pneg %p60
        %s293 = smul.u32 16, %s32
        %s294 = smul.u32 2, %s33
        %p295 = scmp.lt.s32.totalorder %s293, 31
        %s296 = scalar_select %p295, %s293, 31
        %p297 = scmp.lt.s32.totalorder %s294, 1
        %s298 = scalar_select %p297, %s294, 1
        %s299 = smul.addr %s296, 2
        %s300 = sadd.s32 %s298, %s299
        %s301 = smul.addr %s300, 4
        %s302 = scalar_lea.vmem %s2, %s301
        %p303 = pneg %p91
        %p304 = pneg %p88
        %s305 = smul.u32 16, %s32
        %p306 = scmp.lt.s32.totalorder %s305, 31
        %s307 = scalar_select %p306, %s305, 31
        %s308 = smul.addr %s307, 8
        %s309 = scalar_lea.vmem %s3, %s308
        %p310 = pneg %p117
        %p311 = pneg %p114
        %s312 = smul.u32 2, %s33
        %p313 = scmp.lt.s32.totalorder %s312, 1
        %s314 = scalar_select %p313, %s312, 1
        %s315 = smul.addr %s314, 8
        %s316 = scalar_lea.vmem %s4, %s315
        %p317 = pneg %p143
        %p318 = pneg %p140
        %p319 = pneg %p169
        %p320 = pneg %p166
        %s321 = sand.u32 %s156, 1
        %s322 = scalar_lea.sflag [#allocation7], %s321
        %s323 = sand.u32 %s156, 1
        %s324 = smul.addr %s323, 8
        %s325 = scalar_lea.vmem [#allocation8], %s324
        %s326 = smul.u32 16, %s32
        %s327 = smul.u32 2, %s33
        %s328 = smul.u32 16, %s32
        %s329 = smul.u32 2, %s33
        %p330 = scmp.lt.s32.totalorder %s328, 31
        %s331 = scalar_select %p330, %s328, 31
        %p332 = scmp.lt.s32.totalorder %s329, 1
        %s333 = scalar_select %p332, %s329, 1
        %s334 = smul.addr %s331, 2
        %s335 = sadd.s32 %s333, %s334
        %s336 = smul.addr %s335, 4
        %s337 = scalar_lea.vmem %s2, %s336
        %s338 = smul.u32 16, %s32
        %s339 = smul.u32 2, %s33
        %s340 = smul.u32 16, %s32
        %p341 = scmp.lt.s32.totalorder %s340, 31
        %s342 = scalar_select %p341, %s340, 31
        %s343 = smul.addr %s342, 8
        %s344 = scalar_lea.vmem %s3, %s343
        %s345 = smul.u32 16, %s32
        %s346 = smul.u32 2, %s33
        %p347 = scmp.lt.s32.totalorder %s346, 1
        %s348 = scalar_select %p347, %s346, 1
        %s349 = smul.addr %s348, 8
        %s350 = scalar_lea.vmem %s4, %s349
        %s351 = smul.u32 2, %s33
        %p352 = scmp.eq.s32.totalorder %s33, 0
        // Predicated region
        $region41: #{tpu_custom_call.1} parent=35 // pred_check
          %p353 = pneg %p352
        $region42: #{tpu_custom_call.1} parent=35 // pred_check_branch
          %355 = sbr.rel (%p353) target = $region44
        $region43: #{tpu_custom_call.1} parent=35 // pred_region
          %356 = vst [vmem:[#allocation2] sm:$0xff] 0.0
          %357 = vst [vmem:[#allocation2 + $0x8] sm:$0xff] 0.0
        $region44: #{tpu_custom_call.1} parent=35 // pred_fallthru
          _
        %s358 = sld [smem:[#allocation4]]
        %v359 = vld [vmem:[%s281] sm:$0xff]
        %v360 = vld [vmem:[%s281 + $0x8] sm:$0xff]
        %v361 = vld [vmem:[%s281 + $0x10] sm:$0xff]
        %v362 = vld [vmem:[%s281 + $0x18] sm:$0xff]
        %v363 = vld [vmem:[%s281 + $0x20] sm:$0xff]
        %v364 = vld [vmem:[%s281 + $0x28] sm:$0xff]
        %v365 = vld [vmem:[%s281 + $0x30] sm:$0xff]
        %v366 = vld [vmem:[%s281 + $0x38] sm:$0xff]
        %v367 = vld [vmem:[%s281 + $0x40] sm:$0xff]
        %v368 = vld [vmem:[%s281 + $0x48] sm:$0xff]
        %v369 = vld [vmem:[%s281 + $0x50] sm:$0xff]
        %v370 = vld [vmem:[%s281 + $0x58] sm:$0xff]
        %v371 = vld [vmem:[%s281 + $0x60] sm:$0xff]
        %v372 = vld [vmem:[%s281 + $0x68] sm:$0xff]
        %v373 = vld [vmem:[%s281 + $0x70] sm:$0xff]
        %v374 = vld [vmem:[%s281 + $0x78] sm:$0xff]
        %v375 = vunpack.c.l.bf16 %v359
        %v376 = vunpack.c.h.bf16 %v359
        %v377 = vunpack.c.l.bf16 %v360
        %v378 = vunpack.c.h.bf16 %v360
        %v379 = vunpack.c.l.bf16 %v361
        %v380 = vunpack.c.h.bf16 %v361
        %v381 = vunpack.c.l.bf16 %v362
        %v382 = vunpack.c.h.bf16 %v362
        %v383 = vunpack.c.l.bf16 %v363
        %v384 = vunpack.c.h.bf16 %v363
        %v385 = vunpack.c.l.bf16 %v364
        %v386 = vunpack.c.h.bf16 %v364
        %v387 = vunpack.c.l.bf16 %v365
        %v388 = vunpack.c.h.bf16 %v365
        %v389 = vunpack.c.l.bf16 %v366
        %v390 = vunpack.c.h.bf16 %v366
        %v391 = vunpack.c.l.bf16 %v367
        %v392 = vunpack.c.h.bf16 %v367
        %v393 = vunpack.c.l.bf16 %v368
        %v394 = vunpack.c.h.bf16 %v368
        %v395 = vunpack.c.l.bf16 %v369
        %v396 = vunpack.c.h.bf16 %v369
        %v397 = vunpack.c.l.bf16 %v370
        %v398 = vunpack.c.h.bf16 %v370
        %v399 = vunpack.c.l.bf16 %v371
        %v400 = vunpack.c.h.bf16 %v371
        %v401 = vunpack.c.l.bf16 %v372
        %v402 = vunpack.c.h.bf16 %v372
        %v403 = vunpack.c.l.bf16 %v373
        %v404 = vunpack.c.h.bf16 %v373
        %v405 = vunpack.c.l.bf16 %v374
        %v406 = vunpack.c.h.bf16 %v374
        %v407 = vstv %s358
        %v408 = vmul.f32 %v407, %v375
        %v409 = vmul.f32 %v407, %v376
        %v410 = vmul.f32 %v407, %v377
        %v411 = vmul.f32 %v407, %v378
        %v412 = vmul.f32 %v407, %v379
        %v413 = vmul.f32 %v407, %v380
        %v414 = vmul.f32 %v407, %v381
        %v415 = vmul.f32 %v407, %v382
        %v416 = vmul.f32 %v407, %v383
        %v417 = vmul.f32 %v407, %v384
        %v418 = vmul.f32 %v407, %v385
        %v419 = vmul.f32 %v407, %v386
        %v420 = vmul.f32 %v407, %v387
        %v421 = vmul.f32 %v407, %v388
        %v422 = vmul.f32 %v407, %v389
        %v423 = vmul.f32 %v407, %v390
        %v424 = vmul.f32 %v407, %v391
        %v425 = vmul.f32 %v407, %v392
        %v426 = vmul.f32 %v407, %v393
        %v427 = vmul.f32 %v407, %v394
        %v428 = vmul.f32 %v407, %v395
        %v429 = vmul.f32 %v407, %v396
        %v430 = vmul.f32 %v407, %v397
        %v431 = vmul.f32 %v407, %v398
        %v432 = vmul.f32 %v407, %v399
        %v433 = vmul.f32 %v407, %v400
        %v434 = vmul.f32 %v407, %v401
        %v435 = vmul.f32 %v407, %v402
        %v436 = vmul.f32 %v407, %v403
        %v437 = vmul.f32 %v407, %v404
        %v438 = vmul.f32 %v407, %v405
        %v439 = vmul.f32 %v407, %v406
        %s440 = sld [smem:[#allocation4 + $0x1]]
        %s441 = scalar_lea.vmem %s281, 128 [#allocation5]
        %v442 = vld [vmem:[%s441] sm:$0xff]
        %v443 = vld [vmem:[%s441 + $0x8] sm:$0xff]
        %v444 = vld [vmem:[%s441 + $0x10] sm:$0xff]
        %v445 = vld [vmem:[%s441 + $0x18] sm:$0xff]
        %v446 = vld [vmem:[%s441 + $0x20] sm:$0xff]
        %v447 = vld [vmem:[%s441 + $0x28] sm:$0xff]
        %v448 = vld [vmem:[%s441 + $0x30] sm:$0xff]
        %v449 = vld [vmem:[%s441 + $0x38] sm:$0xff]
        %v450 = vld [vmem:[%s441 + $0x40] sm:$0xff]
        %v451 = vld [vmem:[%s441 + $0x48] sm:$0xff]
        %v452 = vld [vmem:[%s441 + $0x50] sm:$0xff]
        %v453 = vld [vmem:[%s441 + $0x58] sm:$0xff]
        %v454 = vld [vmem:[%s441 + $0x60] sm:$0xff]
        %v455 = vld [vmem:[%s441 + $0x68] sm:$0xff]
        %v456 = vld [vmem:[%s441 + $0x70] sm:$0xff]
        %v457 = vld [vmem:[%s441 + $0x78] sm:$0xff]
        %v458 = vunpack.c.l.bf16 %v442
        %v459 = vunpack.c.h.bf16 %v442
        %v460 = vunpack.c.l.bf16 %v443
        %v461 = vunpack.c.h.bf16 %v443
        %v462 = vunpack.c.l.bf16 %v444
        %v463 = vunpack.c.h.bf16 %v444
        %v464 = vunpack.c.l.bf16 %v445
        %v465 = vunpack.c.h.bf16 %v445
        %v466 = vunpack.c.l.bf16 %v446
        %v467 = vunpack.c.h.bf16 %v446
        %v468 = vunpack.c.l.bf16 %v447
        %v469 = vunpack.c.h.bf16 %v447
        %v470 = vunpack.c.l.bf16 %v448
        %v471 = vunpack.c.h.bf16 %v448
        %v472 = vunpack.c.l.bf16 %v449
        %v473 = vunpack.c.h.bf16 %v449
        %v474 = vunpack.c.l.bf16 %v450
        %v475 = vunpack.c.h.bf16 %v450
        %v476 = vunpack.c.l.bf16 %v451
        %v477 = vunpack.c.h.bf16 %v451
        %v478 = vunpack.c.l.bf16 %v452
        %v479 = vunpack.c.h.bf16 %v452
        %v480 = vunpack.c.l.bf16 %v453
        %v481 = vunpack.c.h.bf16 %v453
        %v482 = vunpack.c.l.bf16 %v454
        %v483 = vunpack.c.h.bf16 %v454
        %v484 = vunpack.c.l.bf16 %v455
        %v485 = vunpack.c.h.bf16 %v455
        %v486 = vunpack.c.l.bf16 %v456
        %v487 = vunpack.c.h.bf16 %v456
        %v488 = vunpack.c.l.bf16 %v457
        %v489 = vunpack.c.h.bf16 %v457
        %v490 = vstv %s440
        %v491 = vmul.f32 %v490, %v458
        %v492 = vmul.f32 %v490, %v459
        %v493 = vmul.f32 %v490, %v460
        %v494 = vmul.f32 %v490, %v461
        %v495 = vmul.f32 %v490, %v462
        %v496 = vmul.f32 %v490, %v463
        %v497 = vmul.f32 %v490, %v464
        %v498 = vmul.f32 %v490, %v465
        %v499 = vmul.f32 %v490, %v466
        %v500 = vmul.f32 %v490, %v467
        %v501 = vmul.f32 %v490, %v468
        %v502 = vmul.f32 %v490, %v469
        %v503 = vmul.f32 %v490, %v470
        %v504 = vmul.f32 %v490, %v471
        %v505 = vmul.f32 %v490, %v472
        %v506 = vmul.f32 %v490, %v473
        %v507 = vmul.f32 %v490, %v474
        %v508 = vmul.f32 %v490, %v475
        %v509 = vmul.f32 %v490, %v476
        %v510 = vmul.f32 %v490, %v477
        %v511 = vmul.f32 %v490, %v478
        %v512 = vmul.f32 %v490, %v479
        %v513 = vmul.f32 %v490, %v480
        %v514 = vmul.f32 %v490, %v481
        %v515 = vmul.f32 %v490, %v482
        %v516 = vmul.f32 %v490, %v483
        %v517 = vmul.f32 %v490, %v484
        %v518 = vmul.f32 %v490, %v485
        %v519 = vmul.f32 %v490, %v486
        %v520 = vmul.f32 %v490, %v487
        %v521 = vmul.f32 %v490, %v488
        %v522 = vmul.f32 %v490, %v489
        %v523 = vadd.f32 %v408, %v491
        %v524 = vadd.f32 %v409, %v492
        %v525 = vadd.f32 %v410, %v493
        %v526 = vadd.f32 %v411, %v494
        %v527 = vadd.f32 %v412, %v495
        %v528 = vadd.f32 %v413, %v496
        %v529 = vadd.f32 %v414, %v497
        %v530 = vadd.f32 %v415, %v498
        %v531 = vadd.f32 %v416, %v499
        %v532 = vadd.f32 %v417, %v500
        %v533 = vadd.f32 %v418, %v501
        %v534 = vadd.f32 %v419, %v502
        %v535 = vadd.f32 %v420, %v503
        %v536 = vadd.f32 %v421, %v504
        %v537 = vadd.f32 %v422, %v505
        %v538 = vadd.f32 %v423, %v506
        %v539 = vadd.f32 %v424, %v507
        %v540 = vadd.f32 %v425, %v508
        %v541 = vadd.f32 %v426, %v509
        %v542 = vadd.f32 %v427, %v510
        %v543 = vadd.f32 %v428, %v511
        %v544 = vadd.f32 %v429, %v512
        %v545 = vadd.f32 %v430, %v513
        %v546 = vadd.f32 %v431, %v514
        %v547 = vadd.f32 %v432, %v515
        %v548 = vadd.f32 %v433, %v516
        %v549 = vadd.f32 %v434, %v517
        %v550 = vadd.f32 %v435, %v518
        %v551 = vadd.f32 %v436, %v519
        %v552 = vadd.f32 %v437, %v520
        %v553 = vadd.f32 %v438, %v521
        %v554 = vadd.f32 %v439, %v522
        %s555 = sld [smem:[#allocation4 + $0x2]]
        %s556 = scalar_lea.vmem %s281, 256 [#allocation5]
        %v557 = vld [vmem:[%s556] sm:$0xff]
        %v558 = vld [vmem:[%s556 + $0x8] sm:$0xff]
        %v559 = vld [vmem:[%s556 + $0x10] sm:$0xff]
        %v560 = vld [vmem:[%s556 + $0x18] sm:$0xff]
        %v561 = vld [vmem:[%s556 + $0x20] sm:$0xff]
        %v562 = vld [vmem:[%s556 + $0x28] sm:$0xff]
        %v563 = vld [vmem:[%s556 + $0x30] sm:$0xff]
        %v564 = vld [vmem:[%s556 + $0x38] sm:$0xff]
        %v565 = vld [vmem:[%s556 + $0x40] sm:$0xff]
        %v566 = vld [vmem:[%s556 + $0x48] sm:$0xff]
        %v567 = vld [vmem:[%s556 + $0x50] sm:$0xff]
        %v568 = vld [vmem:[%s556 + $0x58] sm:$0xff]
        %v569 = vld [vmem:[%s556 + $0x60] sm:$0xff]
        %v570 = vld [vmem:[%s556 + $0x68] sm:$0xff]
        %v571 = vld [vmem:[%s556 + $0x70] sm:$0xff]
        %v572 = vld [vmem:[%s556 + $0x78] sm:$0xff]
        %v573 = vunpack.c.l.bf16 %v557
        %v574 = vunpack.c.h.bf16 %v557
        %v575 = vunpack.c.l.bf16 %v558
        %v576 = vunpack.c.h.bf16 %v558
        %v577 = vunpack.c.l.bf16 %v559
        %v578 = vunpack.c.h.bf16 %v559
        %v579 = vunpack.c.l.bf16 %v560
        %v580 = vunpack.c.h.bf16 %v560
        %v581 = vunpack.c.l.bf16 %v561
        %v582 = vunpack.c.h.bf16 %v561
        %v583 = vunpack.c.l.bf16 %v562
        %v584 = vunpack.c.h.bf16 %v562
        %v585 = vunpack.c.l.bf16 %v563
        %v586 = vunpack.c.h.bf16 %v563
        %v587 = vunpack.c.l.bf16 %v564
        %v588 = vunpack.c.h.bf16 %v564
        %v589 = vunpack.c.l.bf16 %v565
        %v590 = vunpack.c.h.bf16 %v565
        %v591 = vunpack.c.l.bf16 %v566
        %v592 = vunpack.c.h.bf16 %v566
        %v593 = vunpack.c.l.bf16 %v567
        %v594 = vunpack.c.h.bf16 %v567
        %v595 = vunpack.c.l.bf16 %v568
        %v596 = vunpack.c.h.bf16 %v568
        %v597 = vunpack.c.l.bf16 %v569
        %v598 = vunpack.c.h.bf16 %v569
        %v599 = vunpack.c.l.bf16 %v570
        %v600 = vunpack.c.h.bf16 %v570
        %v601 = vunpack.c.l.bf16 %v571
        %v602 = vunpack.c.h.bf16 %v571
        %v603 = vunpack.c.l.bf16 %v572
        %v604 = vunpack.c.h.bf16 %v572
        %v605 = vstv %s555
        %v606 = vmul.f32 %v605, %v573
        %v607 = vmul.f32 %v605, %v574
        %v608 = vmul.f32 %v605, %v575
        %v609 = vmul.f32 %v605, %v576
        %v610 = vmul.f32 %v605, %v577
        %v611 = vmul.f32 %v605, %v578
        %v612 = vmul.f32 %v605, %v579
        %v613 = vmul.f32 %v605, %v580
        %v614 = vmul.f32 %v605, %v581
        %v615 = vmul.f32 %v605, %v582
        %v616 = vmul.f32 %v605, %v583
        %v617 = vmul.f32 %v605, %v584
        %v618 = vmul.f32 %v605, %v585
        %v619 = vmul.f32 %v605, %v586
        %v620 = vmul.f32 %v605, %v587
        %v621 = vmul.f32 %v605, %v588
        %v622 = vmul.f32 %v605, %v589
        %v623 = vmul.f32 %v605, %v590
        %v624 = vmul.f32 %v605, %v591
        %v625 = vmul.f32 %v605, %v592
        %v626 = vmul.f32 %v605, %v593
        %v627 = vmul.f32 %v605, %v594
        %v628 = vmul.f32 %v605, %v595
        %v629 = vmul.f32 %v605, %v596
        %v630 = vmul.f32 %v605, %v597
        %v631 = vmul.f32 %v605, %v598
        %v632 = vmul.f32 %v605, %v599
        %v633 = vmul.f32 %v605, %v600
        %v634 = vmul.f32 %v605, %v601
        %v635 = vmul.f32 %v605, %v602
        %v636 = vmul.f32 %v605, %v603
        %v637 = vmul.f32 %v605, %v604
        %v638 = vadd.f32 %v523, %v606
        %v639 = vadd.f32 %v524, %v607
        %v640 = vadd.f32 %v525, %v608
        %v641 = vadd.f32 %v526, %v609
        %v642 = vadd.f32 %v527, %v610
        %v643 = vadd.f32 %v528, %v611
        %v644 = vadd.f32 %v529, %v612
        %v645 = vadd.f32 %v530, %v613
        %v646 = vadd.f32 %v531, %v614
        %v647 = vadd.f32 %v532, %v615
        %v648 = vadd.f32 %v533, %v616
        %v649 = vadd.f32 %v534, %v617
        %v650 = vadd.f32 %v535, %v618
        %v651 = vadd.f32 %v536, %v619
        %v652 = vadd.f32 %v537, %v620
        %v653 = vadd.f32 %v538, %v621
        %v654 = vadd.f32 %v539, %v622
        %v655 = vadd.f32 %v540, %v623
        %v656 = vadd.f32 %v541, %v624
        %v657 = vadd.f32 %v542, %v625
        %v658 = vadd.f32 %v543, %v626
        %v659 = vadd.f32 %v544, %v627
        %v660 = vadd.f32 %v545, %v628
        %v661 = vadd.f32 %v546, %v629
        %v662 = vadd.f32 %v547, %v630
        %v663 = vadd.f32 %v548, %v631
        %v664 = vadd.f32 %v549, %v632
        %v665 = vadd.f32 %v550, %v633
        %v666 = vadd.f32 %v551, %v634
        %v667 = vadd.f32 %v552, %v635
        %v668 = vadd.f32 %v553, %v636
        %v669 = vadd.f32 %v554, %v637
        %s670 = sld [smem:[#allocation4 + $0x3]]
        %s671 = scalar_lea.vmem %s281, 384 [#allocation5]
        %v672 = vld [vmem:[%s671] sm:$0xff]
        %v673 = vld [vmem:[%s671 + $0x8] sm:$0xff]
        %v674 = vld [vmem:[%s671 + $0x10] sm:$0xff]
        %v675 = vld [vmem:[%s671 + $0x18] sm:$0xff]
        %v676 = vld [vmem:[%s671 + $0x20] sm:$0xff]
        %v677 = vld [vmem:[%s671 + $0x28] sm:$0xff]
        %v678 = vld [vmem:[%s671 + $0x30] sm:$0xff]
        %v679 = vld [vmem:[%s671 + $0x38] sm:$0xff]
        %v680 = vld [vmem:[%s671 + $0x40] sm:$0xff]
        %v681 = vld [vmem:[%s671 + $0x48] sm:$0xff]
        %v682 = vld [vmem:[%s671 + $0x50] sm:$0xff]
        %v683 = vld [vmem:[%s671 + $0x58] sm:$0xff]
        %v684 = vld [vmem:[%s671 + $0x60] sm:$0xff]
        %v685 = vld [vmem:[%s671 + $0x68] sm:$0xff]
        %v686 = vld [vmem:[%s671 + $0x70] sm:$0xff]
        %v687 = vld [vmem:[%s671 + $0x78] sm:$0xff]
        %v688 = vunpack.c.l.bf16 %v672
        %v689 = vunpack.c.h.bf16 %v672
        %v690 = vunpack.c.l.bf16 %v673
        %v691 = vunpack.c.h.bf16 %v673
        %v692 = vunpack.c.l.bf16 %v674
        %v693 = vunpack.c.h.bf16 %v674
        %v694 = vunpack.c.l.bf16 %v675
        %v695 = vunpack.c.h.bf16 %v675
        %v696 = vunpack.c.l.bf16 %v676
        %v697 = vunpack.c.h.bf16 %v676
        %v698 = vunpack.c.l.bf16 %v677
        %v699 = vunpack.c.h.bf16 %v677
        %v700 = vunpack.c.l.bf16 %v678
        %v701 = vunpack.c.h.bf16 %v678
        %v702 = vunpack.c.l.bf16 %v679
        %v703 = vunpack.c.h.bf16 %v679
        %v704 = vunpack.c.l.bf16 %v680
        %v705 = vunpack.c.h.bf16 %v680
        %v706 = vunpack.c.l.bf16 %v681
        %v707 = vunpack.c.h.bf16 %v681
        %v708 = vunpack.c.l.bf16 %v682
        %v709 = vunpack.c.h.bf16 %v682
        %v710 = vunpack.c.l.bf16 %v683
        %v711 = vunpack.c.h.bf16 %v683
        %v712 = vunpack.c.l.bf16 %v684
        %v713 = vunpack.c.h.bf16 %v684
        %v714 = vunpack.c.l.bf16 %v685
        %v715 = vunpack.c.h.bf16 %v685
        %v716 = vunpack.c.l.bf16 %v686
        %v717 = vunpack.c.h.bf16 %v686
        %v718 = vunpack.c.l.bf16 %v687
        %v719 = vunpack.c.h.bf16 %v687
        %v720 = vstv %s670
        %v721 = vmul.f32 %v720, %v688
        %v722 = vmul.f32 %v720, %v689
        %v723 = vmul.f32 %v720, %v690
        %v724 = vmul.f32 %v720, %v691
        %v725 = vmul.f32 %v720, %v692
        %v726 = vmul.f32 %v720, %v693
        %v727 = vmul.f32 %v720, %v694
        %v728 = vmul.f32 %v720, %v695
        %v729 = vmul.f32 %v720, %v696
        %v730 = vmul.f32 %v720, %v697
        %v731 = vmul.f32 %v720, %v698
        %v732 = vmul.f32 %v720, %v699
        %v733 = vmul.f32 %v720, %v700
        %v734 = vmul.f32 %v720, %v701
        %v735 = vmul.f32 %v720, %v702
        %v736 = vmul.f32 %v720, %v703
        %v737 = vmul.f32 %v720, %v704
        %v738 = vmul.f32 %v720, %v705
        %v739 = vmul.f32 %v720, %v706
        %v740 = vmul.f32 %v720, %v707
        %v741 = vmul.f32 %v720, %v708
        %v742 = vmul.f32 %v720, %v709
        %v743 = vmul.f32 %v720, %v710
        %v744 = vmul.f32 %v720, %v711
        %v745 = vmul.f32 %v720, %v712
        %v746 = vmul.f32 %v720, %v713
        %v747 = vmul.f32 %v720, %v714
        %v748 = vmul.f32 %v720, %v715
        %v749 = vmul.f32 %v720, %v716
        %v750 = vmul.f32 %v720, %v717
        %v751 = vmul.f32 %v720, %v718
        %v752 = vmul.f32 %v720, %v719
        %v753 = vadd.f32 %v638, %v721
        %v754 = vadd.f32 %v639, %v722
        %v755 = vadd.f32 %v640, %v723
        %v756 = vadd.f32 %v641, %v724
        %v757 = vadd.f32 %v642, %v725
        %v758 = vadd.f32 %v643, %v726
        %v759 = vadd.f32 %v644, %v727
        %v760 = vadd.f32 %v645, %v728
        %v761 = vadd.f32 %v646, %v729
        %v762 = vadd.f32 %v647, %v730
        %v763 = vadd.f32 %v648, %v731
        %v764 = vadd.f32 %v649, %v732
        %v765 = vadd.f32 %v650, %v733
        %v766 = vadd.f32 %v651, %v734
        %v767 = vadd.f32 %v652, %v735
        %v768 = vadd.f32 %v653, %v736
        %v769 = vadd.f32 %v654, %v737
        %v770 = vadd.f32 %v655, %v738
        %v771 = vadd.f32 %v656, %v739
        %v772 = vadd.f32 %v657, %v740
        %v773 = vadd.f32 %v658, %v741
        %v774 = vadd.f32 %v659, %v742
        %v775 = vadd.f32 %v660, %v743
        %v776 = vadd.f32 %v661, %v744
        %v777 = vadd.f32 %v662, %v745
        %v778 = vadd.f32 %v663, %v746
        %v779 = vadd.f32 %v664, %v747
        %v780 = vadd.f32 %v665, %v748
        %v781 = vadd.f32 %v666, %v749
        %v782 = vadd.f32 %v667, %v750
        %v783 = vadd.f32 %v668, %v751
        %v784 = vadd.f32 %v669, %v752
        %s785 = sld [smem:[#allocation4 + $0x4]]
        %s786 = scalar_lea.vmem %s281, 512 [#allocation5]
        %v787 = vld [vmem:[%s786] sm:$0xff]
        %v788 = vld [vmem:[%s786 + $0x8] sm:$0xff]
        %v789 = vld [vmem:[%s786 + $0x10] sm:$0xff]
        %v790 = vld [vmem:[%s786 + $0x18] sm:$0xff]
        %v791 = vld [vmem:[%s786 + $0x20] sm:$0xff]
        %v792 = vld [vmem:[%s786 + $0x28] sm:$0xff]
        %v793 = vld [vmem:[%s786 + $0x30] sm:$0xff]
        %v794 = vld [vmem:[%s786 + $0x38] sm:$0xff]
        %v795 = vld [vmem:[%s786 + $0x40] sm:$0xff]
        %v796 = vld [vmem:[%s786 + $0x48] sm:$0xff]
        %v797 = vld [vmem:[%s786 + $0x50] sm:$0xff]
        %v798 = vld [vmem:[%s786 + $0x58] sm:$0xff]
        %v799 = vld [vmem:[%s786 + $0x60] sm:$0xff]
        %v800 = vld [vmem:[%s786 + $0x68] sm:$0xff]
        %v801 = vld [vmem:[%s786 + $0x70] sm:$0xff]
        %v802 = vld [vmem:[%s786 + $0x78] sm:$0xff]
        %v803 = vunpack.c.l.bf16 %v787
        %v804 = vunpack.c.h.bf16 %v787
        %v805 = vunpack.c.l.bf16 %v788
        %v806 = vunpack.c.h.bf16 %v788
        %v807 = vunpack.c.l.bf16 %v789
        %v808 = vunpack.c.h.bf16 %v789
        %v809 = vunpack.c.l.bf16 %v790
        %v810 = vunpack.c.h.bf16 %v790
        %v811 = vunpack.c.l.bf16 %v791
        %v812 = vunpack.c.h.bf16 %v791
        %v813 = vunpack.c.l.bf16 %v792
        %v814 = vunpack.c.h.bf16 %v792
        %v815 = vunpack.c.l.bf16 %v793
        %v816 = vunpack.c.h.bf16 %v793
        %v817 = vunpack.c.l.bf16 %v794
        %v818 = vunpack.c.h.bf16 %v794
        %v819 = vunpack.c.l.bf16 %v795
        %v820 = vunpack.c.h.bf16 %v795
        %v821 = vunpack.c.l.bf16 %v796
        %v822 = vunpack.c.h.bf16 %v796
        %v823 = vunpack.c.l.bf16 %v797
        %v824 = vunpack.c.h.bf16 %v797
        %v825 = vunpack.c.l.bf16 %v798
        %v826 = vunpack.c.h.bf16 %v798
        %v827 = vunpack.c.l.bf16 %v799
        %v828 = vunpack.c.h.bf16 %v799
        %v829 = vunpack.c.l.bf16 %v800
        %v830 = vunpack.c.h.bf16 %v800
        %v831 = vunpack.c.l.bf16 %v801
        %v832 = vunpack.c.h.bf16 %v801
        %v833 = vunpack.c.l.bf16 %v802
        %v834 = vunpack.c.h.bf16 %v802
        %v835 = vstv %s785
        %v836 = vmul.f32 %v835, %v803
        %v837 = vmul.f32 %v835, %v804
        %v838 = vmul.f32 %v835, %v805
        %v839 = vmul.f32 %v835, %v806
        %v840 = vmul.f32 %v835, %v807
        %v841 = vmul.f32 %v835, %v808
        %v842 = vmul.f32 %v835, %v809
        %v843 = vmul.f32 %v835, %v810
        %v844 = vmul.f32 %v835, %v811
        %v845 = vmul.f32 %v835, %v812
        %v846 = vmul.f32 %v835, %v813
        %v847 = vmul.f32 %v835, %v814
        %v848 = vmul.f32 %v835, %v815
        %v849 = vmul.f32 %v835, %v816
        %v850 = vmul.f32 %v835, %v817
        %v851 = vmul.f32 %v835, %v818
        %v852 = vmul.f32 %v835, %v819
        %v853 = vmul.f32 %v835, %v820
        %v854 = vmul.f32 %v835, %v821
        %v855 = vmul.f32 %v835, %v822
        %v856 = vmul.f32 %v835, %v823
        %v857 = vmul.f32 %v835, %v824
        %v858 = vmul.f32 %v835, %v825
        %v859 = vmul.f32 %v835, %v826
        %v860 = vmul.f32 %v835, %v827
        %v861 = vmul.f32 %v835, %v828
        %v862 = vmul.f32 %v835, %v829
        %v863 = vmul.f32 %v835, %v830
        %v864 = vmul.f32 %v835, %v831
        %v865 = vmul.f32 %v835, %v832
        %v866 = vmul.f32 %v835, %v833
        %v867 = vmul.f32 %v835, %v834
        %v868 = vadd.f32 %v753, %v836
        %v869 = vadd.f32 %v754, %v837
        %v870 = vadd.f32 %v755, %v838
        %v871 = vadd.f32 %v756, %v839
        %v872 = vadd.f32 %v757, %v840
        %v873 = vadd.f32 %v758, %v841
        %v874 = vadd.f32 %v759, %v842
        %v875 = vadd.f32 %v760, %v843
        %v876 = vadd.f32 %v761, %v844
        %v877 = vadd.f32 %v762, %v845
        %v878 = vadd.f32 %v763, %v846
        %v879 = vadd.f32 %v764, %v847
        %v880 = vadd.f32 %v765, %v848
        %v881 = vadd.f32 %v766, %v849
        %v882 = vadd.f32 %v767, %v850
        %v883 = vadd.f32 %v768, %v851
        %v884 = vadd.f32 %v769, %v852
        %v885 = vadd.f32 %v770, %v853
        %v886 = vadd.f32 %v771, %v854
        %v887 = vadd.f32 %v772, %v855
        %v888 = vadd.f32 %v773, %v856
        %v889 = vadd.f32 %v774, %v857
        %v890 = vadd.f32 %v775, %v858
        %v891 = vadd.f32 %v776, %v859
        %v892 = vadd.f32 %v777, %v860
        %v893 = vadd.f32 %v778, %v861
        %v894 = vadd.f32 %v779, %v862
        %v895 = vadd.f32 %v780, %v863
        %v896 = vadd.f32 %v781, %v864
        %v897 = vadd.f32 %v782, %v865
        %v898 = vadd.f32 %v783, %v866
        %v899 = vadd.f32 %v784, %v867
        %s900 = sld [smem:[#allocation4 + $0x5]]
        %s901 = scalar_lea.vmem %s281, 640 [#allocation5]
        %v902 = vld [vmem:[%s901] sm:$0xff]
        %v903 = vld [vmem:[%s901 + $0x8] sm:$0xff]
        %v904 = vld [vmem:[%s901 + $0x10] sm:$0xff]
        %v905 = vld [vmem:[%s901 + $0x18] sm:$0xff]
        %v906 = vld [vmem:[%s901 + $0x20] sm:$0xff]
        %v907 = vld [vmem:[%s901 + $0x28] sm:$0xff]
        %v908 = vld [vmem:[%s901 + $0x30] sm:$0xff]
        %v909 = vld [vmem:[%s901 + $0x38] sm:$0xff]
        %v910 = vld [vmem:[%s901 + $0x40] sm:$0xff]
        %v911 = vld [vmem:[%s901 + $0x48] sm:$0xff]
        %v912 = vld [vmem:[%s901 + $0x50] sm:$0xff]
        %v913 = vld [vmem:[%s901 + $0x58] sm:$0xff]
        %v914 = vld [vmem:[%s901 + $0x60] sm:$0xff]
        %v915 = vld [vmem:[%s901 + $0x68] sm:$0xff]
        %v916 = vld [vmem:[%s901 + $0x70] sm:$0xff]
        %v917 = vld [vmem:[%s901 + $0x78] sm:$0xff]
        %v918 = vunpack.c.l.bf16 %v902
        %v919 = vunpack.c.h.bf16 %v902
        %v920 = vunpack.c.l.bf16 %v903
        %v921 = vunpack.c.h.bf16 %v903
        %v922 = vunpack.c.l.bf16 %v904
        %v923 = vunpack.c.h.bf16 %v904
        %v924 = vunpack.c.l.bf16 %v905
        %v925 = vunpack.c.h.bf16 %v905
        %v926 = vunpack.c.l.bf16 %v906
        %v927 = vunpack.c.h.bf16 %v906
        %v928 = vunpack.c.l.bf16 %v907
        %v929 = vunpack.c.h.bf16 %v907
        %v930 = vunpack.c.l.bf16 %v908
        %v931 = vunpack.c.h.bf16 %v908
        %v932 = vunpack.c.l.bf16 %v909
        %v933 = vunpack.c.h.bf16 %v909
        %v934 = vunpack.c.l.bf16 %v910
        %v935 = vunpack.c.h.bf16 %v910
        %v936 = vunpack.c.l.bf16 %v911
        %v937 = vunpack.c.h.bf16 %v911
        %v938 = vunpack.c.l.bf16 %v912
        %v939 = vunpack.c.h.bf16 %v912
        %v940 = vunpack.c.l.bf16 %v913
        %v941 = vunpack.c.h.bf16 %v913
        %v942 = vunpack.c.l.bf16 %v914
        %v943 = vunpack.c.h.bf16 %v914
        %v944 = vunpack.c.l.bf16 %v915
        %v945 = vunpack.c.h.bf16 %v915
        %v946 = vunpack.c.l.bf16 %v916
        %v947 = vunpack.c.h.bf16 %v916
        %v948 = vunpack.c.l.bf16 %v917
        %v949 = vunpack.c.h.bf16 %v917
        %v950 = vstv %s900
        %v951 = vmul.f32 %v950, %v918
        %v952 = vmul.f32 %v950, %v919
        %v953 = vmul.f32 %v950, %v920
        %v954 = vmul.f32 %v950, %v921
        %v955 = vmul.f32 %v950, %v922
        %v956 = vmul.f32 %v950, %v923
        %v957 = vmul.f32 %v950, %v924
        %v958 = vmul.f32 %v950, %v925
        %v959 = vmul.f32 %v950, %v926
        %v960 = vmul.f32 %v950, %v927
        %v961 = vmul.f32 %v950, %v928
        %v962 = vmul.f32 %v950, %v929
        %v963 = vmul.f32 %v950, %v930
        %v964 = vmul.f32 %v950, %v931
        %v965 = vmul.f32 %v950, %v932
        %v966 = vmul.f32 %v950, %v933
        %v967 = vmul.f32 %v950, %v934
        %v968 = vmul.f32 %v950, %v935
        %v969 = vmul.f32 %v950, %v936
        %v970 = vmul.f32 %v950, %v937
        %v971 = vmul.f32 %v950, %v938
        %v972 = vmul.f32 %v950, %v939
        %v973 = vmul.f32 %v950, %v940
        %v974 = vmul.f32 %v950, %v941
        %v975 = vmul.f32 %v950, %v942
        %v976 = vmul.f32 %v950, %v943
        %v977 = vmul.f32 %v950, %v944
        %v978 = vmul.f32 %v950, %v945
        %v979 = vmul.f32 %v950, %v946
        %v980 = vmul.f32 %v950, %v947
        %v981 = vmul.f32 %v950, %v948
        %v982 = vmul.f32 %v950, %v949
        %v983 = vadd.f32 %v868, %v951
        %v984 = vadd.f32 %v869, %v952
        %v985 = vadd.f32 %v870, %v953
        %v986 = vadd.f32 %v871, %v954
        %v987 = vadd.f32 %v872, %v955
        %v988 = vadd.f32 %v873, %v956
        %v989 = vadd.f32 %v874, %v957
        %v990 = vadd.f32 %v875, %v958
        %v991 = vadd.f32 %v876, %v959
        %v992 = vadd.f32 %v877, %v960
        %v993 = vadd.f32 %v878, %v961
        %v994 = vadd.f32 %v879, %v962
        %v995 = vadd.f32 %v880, %v963
        %v996 = vadd.f32 %v881, %v964
        %v997 = vadd.f32 %v882, %v965
        %v998 = vadd.f32 %v883, %v966
        %v999 = vadd.f32 %v884, %v967
        %v1000 = vadd.f32 %v885, %v968
        %v1001 = vadd.f32 %v886, %v969
        %v1002 = vadd.f32 %v887, %v970
        %v1003 = vadd.f32 %v888, %v971
        %v1004 = vadd.f32 %v889, %v972
        %v1005 = vadd.f32 %v890, %v973
        %v1006 = vadd.f32 %v891, %v974
        %v1007 = vadd.f32 %v892, %v975
        %v1008 = vadd.f32 %v893, %v976
        %v1009 = vadd.f32 %v894, %v977
        %v1010 = vadd.f32 %v895, %v978
        %v1011 = vadd.f32 %v896, %v979
        %v1012 = vadd.f32 %v897, %v980
        %v1013 = vadd.f32 %v898, %v981
        %v1014 = vadd.f32 %v899, %v982
        %s1015 = sld [smem:[#allocation4 + $0x6]]
        %s1016 = scalar_lea.vmem %s281, 768 [#allocation5]
        %v1017 = vld [vmem:[%s1016] sm:$0xff]
        %v1018 = vld [vmem:[%s1016 + $0x8] sm:$0xff]
        %v1019 = vld [vmem:[%s1016 + $0x10] sm:$0xff]
        %v1020 = vld [vmem:[%s1016 + $0x18] sm:$0xff]
        %v1021 = vld [vmem:[%s1016 + $0x20] sm:$0xff]
        %v1022 = vld [vmem:[%s1016 + $0x28] sm:$0xff]
        %v1023 = vld [vmem:[%s1016 + $0x30] sm:$0xff]
        %v1024 = vld [vmem:[%s1016 + $0x38] sm:$0xff]
        %v1025 = vld [vmem:[%s1016 + $0x40] sm:$0xff]
        %v1026 = vld [vmem:[%s1016 + $0x48] sm:$0xff]
        %v1027 = vld [vmem:[%s1016 + $0x50] sm:$0xff]
        %v1028 = vld [vmem:[%s1016 + $0x58] sm:$0xff]
        %v1029 = vld [vmem:[%s1016 + $0x60] sm:$0xff]
        %v1030 = vld [vmem:[%s1016 + $0x68] sm:$0xff]
        %v1031 = vld [vmem:[%s1016 + $0x70] sm:$0xff]
        %v1032 = vld [vmem:[%s1016 + $0x78] sm:$0xff]
        %v1033 = vunpack.c.l.bf16 %v1017
        %v1034 = vunpack.c.h.bf16 %v1017
        %v1035 = vunpack.c.l.bf16 %v1018
        %v1036 = vunpack.c.h.bf16 %v1018
        %v1037 = vunpack.c.l.bf16 %v1019
        %v1038 = vunpack.c.h.bf16 %v1019
        %v1039 = vunpack.c.l.bf16 %v1020
        %v1040 = vunpack.c.h.bf16 %v1020
        %v1041 = vunpack.c.l.bf16 %v1021
        %v1042 = vunpack.c.h.bf16 %v1021
        %v1043 = vunpack.c.l.bf16 %v1022
        %v1044 = vunpack.c.h.bf16 %v1022
        %v1045 = vunpack.c.l.bf16 %v1023
        %v1046 = vunpack.c.h.bf16 %v1023
        %v1047 = vunpack.c.l.bf16 %v1024
        %v1048 = vunpack.c.h.bf16 %v1024
        %v1049 = vunpack.c.l.bf16 %v1025
        %v1050 = vunpack.c.h.bf16 %v1025
        %v1051 = vunpack.c.l.bf16 %v1026
        %v1052 = vunpack.c.h.bf16 %v1026
        %v1053 = vunpack.c.l.bf16 %v1027
        %v1054 = vunpack.c.h.bf16 %v1027
        %v1055 = vunpack.c.l.bf16 %v1028
        %v1056 = vunpack.c.h.bf16 %v1028
        %v1057 = vunpack.c.l.bf16 %v1029
        %v1058 = vunpack.c.h.bf16 %v1029
        %v1059 = vunpack.c.l.bf16 %v1030
        %v1060 = vunpack.c.h.bf16 %v1030
        %v1061 = vunpack.c.l.bf16 %v1031
        %v1062 = vunpack.c.h.bf16 %v1031
        %v1063 = vunpack.c.l.bf16 %v1032
        %v1064 = vunpack.c.h.bf16 %v1032
        %v1065 = vstv %s1015
        %v1066 = vmul.f32 %v1065, %v1033
        %v1067 = vmul.f32 %v1065, %v1034
        %v1068 = vmul.f32 %v1065, %v1035
        %v1069 = vmul.f32 %v1065, %v1036
        %v1070 = vmul.f32 %v1065, %v1037
        %v1071 = vmul.f32 %v1065, %v1038
        %v1072 = vmul.f32 %v1065, %v1039
        %v1073 = vmul.f32 %v1065, %v1040
        %v1074 = vmul.f32 %v1065, %v1041
        %v1075 = vmul.f32 %v1065, %v1042
        %v1076 = vmul.f32 %v1065, %v1043
        %v1077 = vmul.f32 %v1065, %v1044
        %v1078 = vmul.f32 %v1065, %v1045
        %v1079 = vmul.f32 %v1065, %v1046
        %v1080 = vmul.f32 %v1065, %v1047
        %v1081 = vmul.f32 %v1065, %v1048
        %v1082 = vmul.f32 %v1065, %v1049
        %v1083 = vmul.f32 %v1065, %v1050
        %v1084 = vmul.f32 %v1065, %v1051
        %v1085 = vmul.f32 %v1065, %v1052
        %v1086 = vmul.f32 %v1065, %v1053
        %v1087 = vmul.f32 %v1065, %v1054
        %v1088 = vmul.f32 %v1065, %v1055
        %v1089 = vmul.f32 %v1065, %v1056
        %v1090 = vmul.f32 %v1065, %v1057
        %v1091 = vmul.f32 %v1065, %v1058
        %v1092 = vmul.f32 %v1065, %v1059
        %v1093 = vmul.f32 %v1065, %v1060
        %v1094 = vmul.f32 %v1065, %v1061
        %v1095 = vmul.f32 %v1065, %v1062
        %v1096 = vmul.f32 %v1065, %v1063
        %v1097 = vmul.f32 %v1065, %v1064
        %v1098 = vadd.f32 %v983, %v1066
        %v1099 = vadd.f32 %v984, %v1067
        %v1100 = vadd.f32 %v985, %v1068
        %v1101 = vadd.f32 %v986, %v1069
        %v1102 = vadd.f32 %v987, %v1070
        %v1103 = vadd.f32 %v988, %v1071
        %v1104 = vadd.f32 %v989, %v1072
        %v1105 = vadd.f32 %v990, %v1073
        %v1106 = vadd.f32 %v991, %v1074
        %v1107 = vadd.f32 %v992, %v1075
        %v1108 = vadd.f32 %v993, %v1076
        %v1109 = vadd.f32 %v994, %v1077
        %v1110 = vadd.f32 %v995, %v1078
        %v1111 = vadd.f32 %v996, %v1079
        %v1112 = vadd.f32 %v997, %v1080
        %v1113 = vadd.f32 %v998, %v1081
        %v1114 = vadd.f32 %v999, %v1082
        %v1115 = vadd.f32 %v1000, %v1083
        %v1116 = vadd.f32 %v1001, %v1084
        %v1117 = vadd.f32 %v1002, %v1085
        %v1118 = vadd.f32 %v1003, %v1086
        %v1119 = vadd.f32 %v1004, %v1087
        %v1120 = vadd.f32 %v1005, %v1088
        %v1121 = vadd.f32 %v1006, %v1089
        %v1122 = vadd.f32 %v1007, %v1090
        %v1123 = vadd.f32 %v1008, %v1091
        %v1124 = vadd.f32 %v1009, %v1092
        %v1125 = vadd.f32 %v1010, %v1093
        %v1126 = vadd.f32 %v1011, %v1094
        %v1127 = vadd.f32 %v1012, %v1095
        %v1128 = vadd.f32 %v1013, %v1096
        %v1129 = vadd.f32 %v1014, %v1097
        %s1130 = sld [smem:[#allocation4 + $0x7]]
        %s1131 = scalar_lea.vmem %s281, 896 [#allocation5]
        %v1132 = vld [vmem:[%s1131] sm:$0xff]
        %v1133 = vld [vmem:[%s1131 + $0x8] sm:$0xff]
        %v1134 = vld [vmem:[%s1131 + $0x10] sm:$0xff]
        %v1135 = vld [vmem:[%s1131 + $0x18] sm:$0xff]
        %v1136 = vld [vmem:[%s1131 + $0x20] sm:$0xff]
        %v1137 = vld [vmem:[%s1131 + $0x28] sm:$0xff]
        %v1138 = vld [vmem:[%s1131 + $0x30] sm:$0xff]
        %v1139 = vld [vmem:[%s1131 + $0x38] sm:$0xff]
        %v1140 = vld [vmem:[%s1131 + $0x40] sm:$0xff]
        %v1141 = vld [vmem:[%s1131 + $0x48] sm:$0xff]
        %v1142 = vld [vmem:[%s1131 + $0x50] sm:$0xff]
        %v1143 = vld [vmem:[%s1131 + $0x58] sm:$0xff]
        %v1144 = vld [vmem:[%s1131 + $0x60] sm:$0xff]
        %v1145 = vld [vmem:[%s1131 + $0x68] sm:$0xff]
        %v1146 = vld [vmem:[%s1131 + $0x70] sm:$0xff]
        %v1147 = vld [vmem:[%s1131 + $0x78] sm:$0xff]
        %v1148 = vunpack.c.l.bf16 %v1132
        %v1149 = vunpack.c.h.bf16 %v1132
        %v1150 = vunpack.c.l.bf16 %v1133
        %v1151 = vunpack.c.h.bf16 %v1133
        %v1152 = vunpack.c.l.bf16 %v1134
        %v1153 = vunpack.c.h.bf16 %v1134
        %v1154 = vunpack.c.l.bf16 %v1135
        %v1155 = vunpack.c.h.bf16 %v1135
        %v1156 = vunpack.c.l.bf16 %v1136
        %v1157 = vunpack.c.h.bf16 %v1136
        %v1158 = vunpack.c.l.bf16 %v1137
        %v1159 = vunpack.c.h.bf16 %v1137
        %v1160 = vunpack.c.l.bf16 %v1138
        %v1161 = vunpack.c.h.bf16 %v1138
        %v1162 = vunpack.c.l.bf16 %v1139
        %v1163 = vunpack.c.h.bf16 %v1139
        %v1164 = vunpack.c.l.bf16 %v1140
        %v1165 = vunpack.c.h.bf16 %v1140
        %v1166 = vunpack.c.l.bf16 %v1141
        %v1167 = vunpack.c.h.bf16 %v1141
        %v1168 = vunpack.c.l.bf16 %v1142
        %v1169 = vunpack.c.h.bf16 %v1142
        %v1170 = vunpack.c.l.bf16 %v1143
        %v1171 = vunpack.c.h.bf16 %v1143
        %v1172 = vunpack.c.l.bf16 %v1144
        %v1173 = vunpack.c.h.bf16 %v1144
        %v1174 = vunpack.c.l.bf16 %v1145
        %v1175 = vunpack.c.h.bf16 %v1145
        %v1176 = vunpack.c.l.bf16 %v1146
        %v1177 = vunpack.c.h.bf16 %v1146
        %v1178 = vunpack.c.l.bf16 %v1147
        %v1179 = vunpack.c.h.bf16 %v1147
        %v1180 = vstv %s1130
        %v1181 = vmul.f32 %v1180, %v1148
        %v1182 = vmul.f32 %v1180, %v1149
        %v1183 = vmul.f32 %v1180, %v1150
        %v1184 = vmul.f32 %v1180, %v1151
        %v1185 = vmul.f32 %v1180, %v1152
        %v1186 = vmul.f32 %v1180, %v1153
        %v1187 = vmul.f32 %v1180, %v1154
        %v1188 = vmul.f32 %v1180, %v1155
        %v1189 = vmul.f32 %v1180, %v1156
        %v1190 = vmul.f32 %v1180, %v1157
        %v1191 = vmul.f32 %v1180, %v1158
        %v1192 = vmul.f32 %v1180, %v1159
        %v1193 = vmul.f32 %v1180, %v1160
        %v1194 = vmul.f32 %v1180, %v1161
        %v1195 = vmul.f32 %v1180, %v1162
        %v1196 = vmul.f32 %v1180, %v1163
        %v1197 = vmul.f32 %v1180, %v1164
        %v1198 = vmul.f32 %v1180, %v1165
        %v1199 = vmul.f32 %v1180, %v1166
        %v1200 = vmul.f32 %v1180, %v1167
        %v1201 = vmul.f32 %v1180, %v1168
        %v1202 = vmul.f32 %v1180, %v1169
        %v1203 = vmul.f32 %v1180, %v1170
        %v1204 = vmul.f32 %v1180, %v1171
        %v1205 = vmul.f32 %v1180, %v1172
        %v1206 = vmul.f32 %v1180, %v1173
        %v1207 = vmul.f32 %v1180, %v1174
        %v1208 = vmul.f32 %v1180, %v1175
        %v1209 = vmul.f32 %v1180, %v1176
        %v1210 = vmul.f32 %v1180, %v1177
        %v1211 = vmul.f32 %v1180, %v1178
        %v1212 = vmul.f32 %v1180, %v1179
        %v1213 = vadd.f32 %v1098, %v1181
        %v1214 = vadd.f32 %v1099, %v1182
        %v1215 = vadd.f32 %v1100, %v1183
        %v1216 = vadd.f32 %v1101, %v1184
        %v1217 = vadd.f32 %v1102, %v1185
        %v1218 = vadd.f32 %v1103, %v1186
        %v1219 = vadd.f32 %v1104, %v1187
        %v1220 = vadd.f32 %v1105, %v1188
        %v1221 = vadd.f32 %v1106, %v1189
        %v1222 = vadd.f32 %v1107, %v1190
        %v1223 = vadd.f32 %v1108, %v1191
        %v1224 = vadd.f32 %v1109, %v1192
        %v1225 = vadd.f32 %v1110, %v1193
        %v1226 = vadd.f32 %v1111, %v1194
        %v1227 = vadd.f32 %v1112, %v1195
        %v1228 = vadd.f32 %v1113, %v1196
        %v1229 = vadd.f32 %v1114, %v1197
        %v1230 = vadd.f32 %v1115, %v1198
        %v1231 = vadd.f32 %v1116, %v1199
        %v1232 = vadd.f32 %v1117, %v1200
        %v1233 = vadd.f32 %v1118, %v1201
        %v1234 = vadd.f32 %v1119, %v1202
        %v1235 = vadd.f32 %v1120, %v1203
        %v1236 = vadd.f32 %v1121, %v1204
        %v1237 = vadd.f32 %v1122, %v1205
        %v1238 = vadd.f32 %v1123, %v1206
        %v1239 = vadd.f32 %v1124, %v1207
        %v1240 = vadd.f32 %v1125, %v1208
        %v1241 = vadd.f32 %v1126, %v1209
        %v1242 = vadd.f32 %v1127, %v1210
        %v1243 = vadd.f32 %v1128, %v1211
        %v1244 = vadd.f32 %v1129, %v1212
        %v1245 = vld [vmem:[%s344] sm:$0xff]
        %v1246 = vld [vmem:[%s344 + $0x8] sm:$0xff]
        %v1247 = vld [vmem:[%s344 + $0x10] sm:$0xff]
        %v1248 = vld [vmem:[%s344 + $0x18] sm:$0xff]
        %v1249 = vld [vmem:[%s344 + $0x20] sm:$0xff]
        %v1250 = vld [vmem:[%s344 + $0x28] sm:$0xff]
        %v1251 = vld [vmem:[%s344 + $0x30] sm:$0xff]
        %v1252 = vld [vmem:[%s344 + $0x38] sm:$0xff]
        %v1253 = vld [vmem:[%s344 + $0x40] sm:$0xff]
        %v1254 = vld [vmem:[%s344 + $0x48] sm:$0xff]
        %v1255 = vld [vmem:[%s344 + $0x50] sm:$0xff]
        %v1256 = vld [vmem:[%s344 + $0x58] sm:$0xff]
        %v1257 = vld [vmem:[%s344 + $0x60] sm:$0xff]
        %v1258 = vld [vmem:[%s344 + $0x68] sm:$0xff]
        %v1259 = vld [vmem:[%s344 + $0x70] sm:$0xff]
        %v1260 = vld [vmem:[%s344 + $0x78] sm:$0xff]
        %v1261 = vld [vmem:[%s350] sm:$0xff]
        %v1262 = vld [vmem:[%s350 + $0x8] sm:$0xff]
        %v1263 = vld [vmem:[%s350 + $0x10] sm:$0xff]
        %v1264 = vld [vmem:[%s350 + $0x18] sm:$0xff]
        %vm1265 = vcmask 130048
        %v1267 = vsel %vm1265, %v1245, 0
        %v1270 = vsel %vm1265, %v1246, 0
        %v1273 = vsel %vm1265, %v1247, 0
        %v1276 = vsel %vm1265, %v1248, 0
        %v1279 = vsel %vm1265, %v1249, 0
        %v1282 = vsel %vm1265, %v1250, 0
        %v1285 = vsel %vm1265, %v1251, 0
        %v1288 = vsel %vm1265, %v1252, 0
        %v1291 = vsel %vm1265, %v1253, 0
        %v1294 = vsel %vm1265, %v1254, 0
        %v1297 = vsel %vm1265, %v1255, 0
        %v1300 = vsel %vm1265, %v1256, 0
        %v1303 = vsel %vm1265, %v1257, 0
        %v1306 = vsel %vm1265, %v1258, 0
        %v1309 = vsel %vm1265, %v1259, 0
        %v1312 = vsel %vm1265, %v1260, 0
        %1314 = vmatprep.subr.mxu0 %v1262
        %1315 = vmatpush1.msra.mxu0 %v1261
        %1316 = vmatprep.subr.mxu0 %v1264
        %1317 = vmatpush1.msra.mxu0 %v1263
        %1318 = vmatprep.subr.mxu0 0.0
        %1319 = vmatpush1.msra.mxu0 0.0
        %1320 = vmatprep.subr.mxu0 0.0
        %1321 = vmatpush1.msra.mxu0 0.0
        %1322 = vmatprep.subr.mxu0 0.0
        %1323 = vmatpush1.msra.mxu0 0.0
        %1324 = vmatprep.subr.mxu0 0.0
        %1325 = vmatpush1.msra.mxu0 0.0
        %1326 = vmatprep.subr.mxu0 0.0
        %1327 = vmatpush1.msra.mxu0 0.0
        %1328 = vmatprep.subr.mxu0 0.0
        %1329 = vmatpush1.msra.mxu0 0.0
        %1330 = vmatprep.subr.mxu0 0.0
        %1331 = vmatpush1.msra.mxu0 0.0
        %1332 = vmatprep.subr.mxu0 0.0
        %1333 = vmatpush1.msra.mxu0 0.0
        %1334 = vmatprep.subr.mxu0 0.0
        %1335 = vmatpush1.msra.mxu0 0.0
        %1336 = vmatprep.subr.mxu0 0.0
        %1337 = vmatpush1.msra.mxu0 0.0
        %1338 = vmatprep.subr.mxu0 0.0
        %1339 = vmatpush1.msra.mxu0 0.0
        %1340 = vmatprep.subr.mxu0 0.0
        %1341 = vmatpush1.msra.mxu0 0.0
        %1342 = vmatprep.subr.mxu0 0.0
        %1343 = vmatpush1.msra.mxu0 0.0
        %1344 = vmatprep.subr.mxu0 0.0
        %1345 = vmatpush1.msra.mxu0 0.0
        %1346 = vmatprep.subr.mxu0 0.0
        %1347 = vmatpush1.msra.mxu0 0.0
        %1348 = vmatprep.subr.mxu0 0.0
        %1349 = vmatpush1.msra.mxu0 0.0
        %1350 = vmatprep.subr.mxu0 0.0
        %1351 = vmatpush1.msra.mxu0 0.0
        %1352 = vmatprep.subr.mxu0 0.0
        %1353 = vmatpush1.msra.mxu0 0.0
        %1354 = vmatprep.subr.mxu0 0.0
        %1355 = vmatpush1.msra.mxu0 0.0
        %1356 = vmatprep.subr.mxu0 0.0
        %1357 = vmatpush1.msra.mxu0 0.0
        %1358 = vmatprep.subr.mxu0 0.0
        %1359 = vmatpush1.msra.mxu0 0.0
        %1360 = vmatprep.subr.mxu0 0.0
        %1361 = vmatpush1.msra.mxu0 0.0
        %1362 = vmatprep.subr.mxu0 0.0
        %1363 = vmatpush1.msra.mxu0 0.0
        %1364 = vmatprep.subr.mxu0 0.0
        %1365 = vmatpush1.msra.mxu0 0.0
        %1366 = vmatprep.subr.mxu0 0.0
        %1367 = vmatpush1.msra.mxu0 0.0
        %1368 = vmatprep.subr.mxu0 0.0
        %1369 = vmatpush1.msra.mxu0 0.0
        %1370 = vmatprep.subr.mxu0 0.0
        %1371 = vmatpush1.msra.mxu0 0.0
        %1372 = vmatprep.subr.mxu0 0.0
        %1373 = vmatpush1.msra.mxu0 0.0
        %1374 = vmatprep.subr.mxu0 0.0
        %1375 = vmatpush1.msra.mxu0 0.0
        %1376 = vmatprep.subr.mxu0 0.0
        %1377 = vmatpush1.msra.mxu0 0.0
        %1378 = vmatprep.mubr.f32.mxu0 0.0
        %1379 = vmatmul.mubr.f32.gmra.mrb[0].mxu0 %v1267
        %v1380 = vpop.f32.mrb[0].mxu0
        %v1381 = vadd.f32 0.0, %v1380
        %v1382 = vpop.f32.mrb[0].mxu0
        %v1383 = vadd.f32 0.0, %v1382
        %1384 = vmatprep.mubr.f32.mxu0 0.0
        %1385 = vmatmul.mubr.f32.gmra.mrb[0].mxu0 %v1270
        %v1386 = vpop.f32.mrb[0].mxu0
        %v1387 = vadd.f32 0.0, %v1386
        %v1388 = vpop.f32.mrb[0].mxu0
        %v1389 = vadd.f32 0.0, %v1388
        %1390 = vmatprep.mubr.f32.mxu0 0.0
        %1391 = vmatmul.mubr.f32.gmra.mrb[0].mxu0 %v1273
        %v1392 = vpop.f32.mrb[0].mxu0
        %v1393 = vadd.f32 0.0, %v1392
        %v1394 = vpop.f32.mrb[0].mxu0
        %v1395 = vadd.f32 0.0, %v1394
        %1396 = vmatprep.mubr.f32.mxu0 0.0
        %1397 = vmatmul.mubr.f32.gmra.mrb[0].mxu0 %v1276
        %v1398 = vpop.f32.mrb[0].mxu0
        %v1399 = vadd.f32 0.0, %v1398
        %v1400 = vpop.f32.mrb[0].mxu0
        %v1401 = vadd.f32 0.0, %v1400
        %1402 = vmatprep.mubr.f32.mxu0 0.0
        %1403 = vmatmul.mubr.f32.gmra.mrb[0].mxu0 %v1279
        %v1404 = vpop.f32.mrb[0].mxu0
        %v1405 = vadd.f32 0.0, %v1404
        %v1406 = vpop.f32.mrb[0].mxu0
        %v1407 = vadd.f32 0.0, %v1406
        %1408 = vmatprep.mubr.f32.mxu0 0.0
        %1409 = vmatmul.mubr.f32.gmra.mrb[0].mxu0 %v1282
        %v1410 = vpop.f32.mrb[0].mxu0
        %v1411 = vadd.f32 0.0, %v1410
        %v1412 = vpop.f32.mrb[0].mxu0
        %v1413 = vadd.f32 0.0, %v1412
        %1414 = vmatprep.mubr.f32.mxu0 0.0
        %1415 = vmatmul.mubr.f32.gmra.mrb[0].mxu0 %v1285
        %v1416 = vpop.f32.mrb[0].mxu0
        %v1417 = vadd.f32 0.0, %v1416
        %v1418 = vpop.f32.mrb[0].mxu0
        %v1419 = vadd.f32 0.0, %v1418
        %1420 = vmatprep.mubr.f32.mxu0 0.0
        %1421 = vmatmul.mubr.f32.gmra.mrb[0].mxu0 %v1288
        %v1422 = vpop.f32.mrb[0].mxu0
        %v1423 = vadd.f32 0.0, %v1422
        %v1424 = vpop.f32.mrb[0].mxu0
        %v1425 = vadd.f32 0.0, %v1424
        %1426 = vmatprep.mubr.f32.mxu0 0.0
        %1427 = vmatmul.mubr.f32.gmra.mrb[0].mxu0 %v1291
        %v1428 = vpop.f32.mrb[0].mxu0
        %v1429 = vadd.f32 0.0, %v1428
        %v1430 = vpop.f32.mrb[0].mxu0
        %v1431 = vadd.f32 0.0, %v1430
        %1432 = vmatprep.mubr.f32.mxu0 0.0
        %1433 = vmatmul.mubr.f32.gmra.mrb[0].mxu0 %v1294
        %v1434 = vpop.f32.mrb[0].mxu0
        %v1435 = vadd.f32 0.0, %v1434
        %v1436 = vpop.f32.mrb[0].mxu0
        %v1437 = vadd.f32 0.0, %v1436
        %1438 = vmatprep.mubr.f32.mxu0 0.0
        %1439 = vmatmul.mubr.f32.gmra.mrb[0].mxu0 %v1297
        %v1440 = vpop.f32.mrb[0].mxu0
        %v1441 = vadd.f32 0.0, %v1440
        %v1442 = vpop.f32.mrb[0].mxu0
        %v1443 = vadd.f32 0.0, %v1442
        %1444 = vmatprep.mubr.f32.mxu0 0.0
        %1445 = vmatmul.mubr.f32.gmra.mrb[0].mxu0 %v1300
        %v1446 = vpop.f32.mrb[0].mxu0
        %v1447 = vadd.f32 0.0, %v1446
        %v1448 = vpop.f32.mrb[0].mxu0
        %v1449 = vadd.f32 0.0, %v1448
        %1450 = vmatprep.mubr.f32.mxu0 0.0
        %1451 = vmatmul.mubr.f32.gmra.mrb[0].mxu0 %v1303
        %v1452 = vpop.f32.mrb[0].mxu0
        %v1453 = vadd.f32 0.0, %v1452
        %v1454 = vpop.f32.mrb[0].mxu0
        %v1455 = vadd.f32 0.0, %v1454
        %1456 = vmatprep.mubr.f32.mxu0 0.0
        %1457 = vmatmul.mubr.f32.gmra.mrb[0].mxu0 %v1306
        %v1458 = vpop.f32.mrb[0].mxu0
        %v1459 = vadd.f32 0.0, %v1458
        %v1460 = vpop.f32.mrb[0].mxu0
        %v1461 = vadd.f32 0.0, %v1460
        %1462 = vmatprep.mubr.f32.mxu0 0.0
        %1463 = vmatmul.mubr.f32.gmra.mrb[0].mxu0 %v1309
        %v1464 = vpop.f32.mrb[0].mxu0
        %v1465 = vadd.f32 0.0, %v1464
        %v1466 = vpop.f32.mrb[0].mxu0
        %v1467 = vadd.f32 0.0, %v1466
        %1468 = vmatprep.mubr.f32.mxu0 0.0
        %1469 = vmatmul.mubr.f32.gmra.mrb[0].mxu0 %v1312
        %v1470 = vpop.f32.mrb[0].mxu0
        %v1471 = vadd.f32 0.0, %v1470
        %v1472 = vpop.f32.mrb[0].mxu0
        %v1473 = vadd.f32 0.0, %v1472
        %1474 = vdwg.mxu0
        %v1475 = vand.u32 2147483647, %v1381
        %v1476 = vand.u32 2147483647, %v1383
        %v1477 = vand.u32 2147483647, %v1387
        %v1478 = vand.u32 2147483647, %v1389
        %v1479 = vand.u32 2147483647, %v1393
        %v1480 = vand.u32 2147483647, %v1395
        %v1481 = vand.u32 2147483647, %v1399
        %v1482 = vand.u32 2147483647, %v1401
        %v1483 = vand.u32 2147483647, %v1405
        %v1484 = vand.u32 2147483647, %v1407
        %v1485 = vand.u32 2147483647, %v1411
        %v1486 = vand.u32 2147483647, %v1413
        %v1487 = vand.u32 2147483647, %v1417
        %v1488 = vand.u32 2147483647, %v1419
        %v1489 = vand.u32 2147483647, %v1423
        %v1490 = vand.u32 2147483647, %v1425
        %v1491 = vand.u32 2147483647, %v1429
        %v1492 = vand.u32 2147483647, %v1431
        %v1493 = vand.u32 2147483647, %v1435
        %v1494 = vand.u32 2147483647, %v1437
        %v1495 = vand.u32 2147483647, %v1441
        %v1496 = vand.u32 2147483647, %v1443
        %v1497 = vand.u32 2147483647, %v1447
        %v1498 = vand.u32 2147483647, %v1449
        %v1499 = vand.u32 2147483647, %v1453
        %v1500 = vand.u32 2147483647, %v1455
        %v1501 = vand.u32 2147483647, %v1459
        %v1502 = vand.u32 2147483647, %v1461
        %v1503 = vand.u32 2147483647, %v1465
        %v1504 = vand.u32 2147483647, %v1467
        %v1505 = vand.u32 2147483647, %v1471
        %v1506 = vand.u32 2147483647, %v1473
        %v1507 = vsub.f32 0.0, %v1475
        %v1508 = vsub.f32 0.0, %v1476
        %v1509 = vsub.f32 0.0, %v1477
        %v1510 = vsub.f32 0.0, %v1478
        %v1511 = vsub.f32 0.0, %v1479
        %v1512 = vsub.f32 0.0, %v1480
        %v1513 = vsub.f32 0.0, %v1481
        %v1514 = vsub.f32 0.0, %v1482
        %v1515 = vsub.f32 0.0, %v1483
        %v1516 = vsub.f32 0.0, %v1484
        %v1517 = vsub.f32 0.0, %v1485
        %v1518 = vsub.f32 0.0, %v1486
        %v1519 = vsub.f32 0.0, %v1487
        %v1520 = vsub.f32 0.0, %v1488
        %v1521 = vsub.f32 0.0, %v1489
        %v1522 = vsub.f32 0.0, %v1490
        %v1523 = vsub.f32 0.0, %v1491
        %v1524 = vsub.f32 0.0, %v1492
        %v1525 = vsub.f32 0.0, %v1493
        %v1526 = vsub.f32 0.0, %v1494
        %v1527 = vsub.f32 0.0, %v1495
        %v1528 = vsub.f32 0.0, %v1496
        %v1529 = vsub.f32 0.0, %v1497
        %v1530 = vsub.f32 0.0, %v1498
        %v1531 = vsub.f32 0.0, %v1499
        %v1532 = vsub.f32 0.0, %v1500
        %v1533 = vsub.f32 0.0, %v1501
        %v1534 = vsub.f32 0.0, %v1502
        %v1535 = vsub.f32 0.0, %v1503
        %v1536 = vsub.f32 0.0, %v1504
        %v1537 = vsub.f32 0.0, %v1505
        %v1538 = vsub.f32 0.0, %v1506
        %v1539 = vmul.f32 %v1507, 1.442695
        %v1540 = vpow.pop %v1539
        %v1541 = vmul.f32 %v1508, 1.442695
        %v1542 = vpow.pop %v1541
        %v1543 = vmul.f32 %v1509, 1.442695
        %v1544 = vpow.pop %v1543
        %v1545 = vmul.f32 %v1510, 1.442695
        %v1546 = vpow.pop %v1545
        %v1547 = vmul.f32 %v1511, 1.442695
        %v1548 = vpow.pop %v1547
        %v1549 = vmul.f32 %v1512, 1.442695
        %v1550 = vpow.pop %v1549
        %v1551 = vmul.f32 %v1513, 1.442695
        %v1552 = vpow.pop %v1551
        %v1553 = vmul.f32 %v1514, 1.442695
        %v1554 = vpow.pop %v1553
        %v1555 = vmul.f32 %v1515, 1.442695
        %v1556 = vpow.pop %v1555
        %v1557 = vmul.f32 %v1516, 1.442695
        %v1558 = vpow.pop %v1557
        %v1559 = vmul.f32 %v1517, 1.442695
        %v1560 = vpow.pop %v1559
        %v1561 = vmul.f32 %v1518, 1.442695
        %v1562 = vpow.pop %v1561
        %v1563 = vmul.f32 %v1519, 1.442695
        %v1564 = vpow.pop %v1563
        %v1565 = vmul.f32 %v1520, 1.442695
        %v1566 = vpow.pop %v1565
        %v1567 = vmul.f32 %v1521, 1.442695
        %v1568 = vpow.pop %v1567
        %v1569 = vmul.f32 %v1522, 1.442695
        %v1570 = vpow.pop %v1569
        %v1571 = vmul.f32 %v1523, 1.442695
        %v1572 = vpow.pop %v1571
        %v1573 = vmul.f32 %v1524, 1.442695
        %v1574 = vpow.pop %v1573
        %v1575 = vmul.f32 %v1525, 1.442695
        %v1576 = vpow.pop %v1575
        %v1577 = vmul.f32 %v1526, 1.442695
        %v1578 = vpow.pop %v1577
        %v1579 = vmul.f32 %v1527, 1.442695
        %v1580 = vpow.pop %v1579
        %v1581 = vmul.f32 %v1528, 1.442695
        %v1582 = vpow.pop %v1581
        %v1583 = vmul.f32 %v1529, 1.442695
        %v1584 = vpow.pop %v1583
        %v1585 = vmul.f32 %v1530, 1.442695
        %v1586 = vpow.pop %v1585
        %v1587 = vmul.f32 %v1531, 1.442695
        %v1588 = vpow.pop %v1587
        %v1589 = vmul.f32 %v1532, 1.442695
        %v1590 = vpow.pop %v1589
        %v1591 = vmul.f32 %v1533, 1.442695
        %v1592 = vpow.pop %v1591
        %v1593 = vmul.f32 %v1534, 1.442695
        %v1594 = vpow.pop %v1593
        %v1595 = vmul.f32 %v1535, 1.442695
        %v1596 = vpow.pop %v1595
        %v1597 = vmul.f32 %v1536, 1.442695
        %v1598 = vpow.pop %v1597
        %v1599 = vmul.f32 %v1537, 1.442695
        %v1600 = vpow.pop %v1599
        %v1601 = vmul.f32 %v1538, 1.442695
        %v1602 = vpow.pop %v1601
        %v1603 = vadd.f32 %v1540, 1.0
        %v1604 = vadd.f32 %v1542, 1.0
        %v1605 = vadd.f32 %v1544, 1.0
        %v1606 = vadd.f32 %v1546, 1.0
        %v1607 = vadd.f32 %v1548, 1.0
        %v1608 = vadd.f32 %v1550, 1.0
        %v1609 = vadd.f32 %v1552, 1.0
        %v1610 = vadd.f32 %v1554, 1.0
        %v1611 = vadd.f32 %v1556, 1.0
        %v1612 = vadd.f32 %v1558, 1.0
        %v1613 = vadd.f32 %v1560, 1.0
        %v1614 = vadd.f32 %v1562, 1.0
        %v1615 = vadd.f32 %v1564, 1.0
        %v1616 = vadd.f32 %v1566, 1.0
        %v1617 = vadd.f32 %v1568, 1.0
        %v1618 = vadd.f32 %v1570, 1.0
        %v1619 = vadd.f32 %v1572, 1.0
        %v1620 = vadd.f32 %v1574, 1.0
        %v1621 = vadd.f32 %v1576, 1.0
        %v1622 = vadd.f32 %v1578, 1.0
        %v1623 = vadd.f32 %v1580, 1.0
        %v1624 = vadd.f32 %v1582, 1.0
        %v1625 = vadd.f32 %v1584, 1.0
        %v1626 = vadd.f32 %v1586, 1.0
        %v1627 = vadd.f32 %v1588, 1.0
        %v1628 = vadd.f32 %v1590, 1.0
        %v1629 = vadd.f32 %v1592, 1.0
        %v1630 = vadd.f32 %v1594, 1.0
        %v1631 = vadd.f32 %v1596, 1.0
        %v1632 = vadd.f32 %v1598, 1.0
        %v1633 = vadd.f32 %v1600, 1.0
        %v1634 = vadd.f32 %v1602, 1.0
        %v1635 = vlog2.pop %v1603
        %v1636 = vmul.f32 %v1635, 0.6931472
        %v1637 = vlog2.pop %v1604
        %v1638 = vmul.f32 %v1637, 0.6931472
        %v1639 = vlog2.pop %v1605
        %v1640 = vmul.f32 %v1639, 0.6931472
        %v1641 = vlog2.pop %v1606
        %v1642 = vmul.f32 %v1641, 0.6931472
        %v1643 = vlog2.pop %v1607
        %v1644 = vmul.f32 %v1643, 0.6931472
        %v1645 = vlog2.pop %v1608
        %v1646 = vmul.f32 %v1645, 0.6931472
        %v1647 = vlog2.pop %v1609
        %v1648 = vmul.f32 %v1647, 0.6931472
        %v1649 = vlog2.pop %v1610
        %v1650 = vmul.f32 %v1649, 0.6931472
        %v1651 = vlog2.pop %v1611
        %v1652 = vmul.f32 %v1651, 0.6931472
        %v1653 = vlog2.pop %v1612
        %v1654 = vmul.f32 %v1653, 0.6931472
        %v1655 = vlog2.pop %v1613
        %v1656 = vmul.f32 %v1655, 0.6931472
        %v1657 = vlog2.pop %v1614
        %v1658 = vmul.f32 %v1657, 0.6931472
        %v1659 = vlog2.pop %v1615
        %v1660 = vmul.f32 %v1659, 0.6931472
        %v1661 = vlog2.pop %v1616
        %v1662 = vmul.f32 %v1661, 0.6931472
        %v1663 = vlog2.pop %v1617
        %v1664 = vmul.f32 %v1663, 0.6931472
        %v1665 = vlog2.pop %v1618
        %v1666 = vmul.f32 %v1665, 0.6931472
        %v1667 = vlog2.pop %v1619
        %v1668 = vmul.f32 %v1667, 0.6931472
        %v1669 = vlog2.pop %v1620
        %v1670 = vmul.f32 %v1669, 0.6931472
        %v1671 = vlog2.pop %v1621
        %v1672 = vmul.f32 %v1671, 0.6931472
        %v1673 = vlog2.pop %v1622
        %v1674 = vmul.f32 %v1673, 0.6931472
        %v1675 = vlog2.pop %v1623
        %v1676 = vmul.f32 %v1675, 0.6931472
        %v1677 = vlog2.pop %v1624
        %v1678 = vmul.f32 %v1677, 0.6931472
        %v1679 = vlog2.pop %v1625
        %v1680 = vmul.f32 %v1679, 0.6931472
        %v1681 = vlog2.pop %v1626
        %v1682 = vmul.f32 %v1681, 0.6931472
        %v1683 = vlog2.pop %v1627
        %v1684 = vmul.f32 %v1683, 0.6931472
        %v1685 = vlog2.pop %v1628
        %v1686 = vmul.f32 %v1685, 0.6931472
        %v1687 = vlog2.pop %v1629
        %v1688 = vmul.f32 %v1687, 0.6931472
        %v1689 = vlog2.pop %v1630
        %v1690 = vmul.f32 %v1689, 0.6931472
        %v1691 = vlog2.pop %v1631
        %v1692 = vmul.f32 %v1691, 0.6931472
        %v1693 = vlog2.pop %v1632
        %v1694 = vmul.f32 %v1693, 0.6931472
        %v1695 = vlog2.pop %v1633
        %v1696 = vmul.f32 %v1695, 0.6931472
        %v1697 = vlog2.pop %v1634
        %v1698 = vmul.f32 %v1697, 0.6931472
        %v1699 = vsub.f32 0.0, %v1381
        %v1700 = vsub.f32 0.0, %v1383
        %v1701 = vsub.f32 0.0, %v1387
        %v1702 = vsub.f32 0.0, %v1389
        %v1703 = vsub.f32 0.0, %v1393
        %v1704 = vsub.f32 0.0, %v1395
        %v1705 = vsub.f32 0.0, %v1399
        %v1706 = vsub.f32 0.0, %v1401
        %v1707 = vsub.f32 0.0, %v1405
        %v1708 = vsub.f32 0.0, %v1407
        %v1709 = vsub.f32 0.0, %v1411
        %v1710 = vsub.f32 0.0, %v1413
        %v1711 = vsub.f32 0.0, %v1417
        %v1712 = vsub.f32 0.0, %v1419
        %v1713 = vsub.f32 0.0, %v1423
        %v1714 = vsub.f32 0.0, %v1425
        %v1715 = vsub.f32 0.0, %v1429
        %v1716 = vsub.f32 0.0, %v1431
        %v1717 = vsub.f32 0.0, %v1435
        %v1718 = vsub.f32 0.0, %v1437
        %v1719 = vsub.f32 0.0, %v1441
        %v1720 = vsub.f32 0.0, %v1443
        %v1721 = vsub.f32 0.0, %v1447
        %v1722 = vsub.f32 0.0, %v1449
        %v1723 = vsub.f32 0.0, %v1453
        %v1724 = vsub.f32 0.0, %v1455
        %v1725 = vsub.f32 0.0, %v1459
        %v1726 = vsub.f32 0.0, %v1461
        %v1727 = vsub.f32 0.0, %v1465
        %v1728 = vsub.f32 0.0, %v1467
        %v1729 = vsub.f32 0.0, %v1471
        %v1730 = vsub.f32 0.0, %v1473
        %v1731 = vmax.f32 %v1699, 0.0
        %v1732 = vmax.f32 %v1700, 0.0
        %v1733 = vmax.f32 %v1701, 0.0
        %v1734 = vmax.f32 %v1702, 0.0
        %v1735 = vmax.f32 %v1703, 0.0
        %v1736 = vmax.f32 %v1704, 0.0
        %v1737 = vmax.f32 %v1705, 0.0
        %v1738 = vmax.f32 %v1706, 0.0
        %v1739 = vmax.f32 %v1707, 0.0
        %v1740 = vmax.f32 %v1708, 0.0
        %v1741 = vmax.f32 %v1709, 0.0
        %v1742 = vmax.f32 %v1710, 0.0
        %v1743 = vmax.f32 %v1711, 0.0
        %v1744 = vmax.f32 %v1712, 0.0
        %v1745 = vmax.f32 %v1713, 0.0
        %v1746 = vmax.f32 %v1714, 0.0
        %v1747 = vmax.f32 %v1715, 0.0
        %v1748 = vmax.f32 %v1716, 0.0
        %v1749 = vmax.f32 %v1717, 0.0
        %v1750 = vmax.f32 %v1718, 0.0
        %v1751 = vmax.f32 %v1719, 0.0
        %v1752 = vmax.f32 %v1720, 0.0
        %v1753 = vmax.f32 %v1721, 0.0
        %v1754 = vmax.f32 %v1722, 0.0
        %v1755 = vmax.f32 %v1723, 0.0
        %v1756 = vmax.f32 %v1724, 0.0
        %v1757 = vmax.f32 %v1725, 0.0
        %v1758 = vmax.f32 %v1726, 0.0
        %v1759 = vmax.f32 %v1727, 0.0
        %v1760 = vmax.f32 %v1728, 0.0
        %v1761 = vmax.f32 %v1729, 0.0
        %v1762 = vmax.f32 %v1730, 0.0
        %v1763 = vadd.f32 %v1731, %v1636
        %v1764 = vadd.f32 %v1732, %v1638
        %v1765 = vadd.f32 %v1733, %v1640
        %v1766 = vadd.f32 %v1734, %v1642
        %v1767 = vadd.f32 %v1735, %v1644
        %v1768 = vadd.f32 %v1736, %v1646
        %v1769 = vadd.f32 %v1737, %v1648
        %v1770 = vadd.f32 %v1738, %v1650
        %v1771 = vadd.f32 %v1739, %v1652
        %v1772 = vadd.f32 %v1740, %v1654
        %v1773 = vadd.f32 %v1741, %v1656
        %v1774 = vadd.f32 %v1742, %v1658
        %v1775 = vadd.f32 %v1743, %v1660
        %v1776 = vadd.f32 %v1744, %v1662
        %v1777 = vadd.f32 %v1745, %v1664
        %v1778 = vadd.f32 %v1746, %v1666
        %v1779 = vadd.f32 %v1747, %v1668
        %v1780 = vadd.f32 %v1748, %v1670
        %v1781 = vadd.f32 %v1749, %v1672
        %v1782 = vadd.f32 %v1750, %v1674
        %v1783 = vadd.f32 %v1751, %v1676
        %v1784 = vadd.f32 %v1752, %v1678
        %v1785 = vadd.f32 %v1753, %v1680
        %v1786 = vadd.f32 %v1754, %v1682
        %v1787 = vadd.f32 %v1755, %v1684
        %v1788 = vadd.f32 %v1756, %v1686
        %v1789 = vadd.f32 %v1757, %v1688
        %v1790 = vadd.f32 %v1758, %v1690
        %v1791 = vadd.f32 %v1759, %v1692
        %v1792 = vadd.f32 %v1760, %v1694
        %v1793 = vadd.f32 %v1761, %v1696
        %v1794 = vadd.f32 %v1762, %v1698
        %v1795 = vadd.f32 %v1763, %v1381
        %v1796 = vadd.f32 %v1764, %v1383
        %v1797 = vadd.f32 %v1765, %v1387
        %v1798 = vadd.f32 %v1766, %v1389
        %v1799 = vadd.f32 %v1767, %v1393
        %v1800 = vadd.f32 %v1768, %v1395
        %v1801 = vadd.f32 %v1769, %v1399
        %v1802 = vadd.f32 %v1770, %v1401
        %v1803 = vadd.f32 %v1771, %v1405
        %v1804 = vadd.f32 %v1772, %v1407
        %v1805 = vadd.f32 %v1773, %v1411
        %v1806 = vadd.f32 %v1774, %v1413
        %v1807 = vadd.f32 %v1775, %v1417
        %v1808 = vadd.f32 %v1776, %v1419
        %v1809 = vadd.f32 %v1777, %v1423
        %v1810 = vadd.f32 %v1778, %v1425
        %v1811 = vadd.f32 %v1779, %v1429
        %v1812 = vadd.f32 %v1780, %v1431
        %v1813 = vadd.f32 %v1781, %v1435
        %v1814 = vadd.f32 %v1782, %v1437
        %v1815 = vadd.f32 %v1783, %v1441
        %v1816 = vadd.f32 %v1784, %v1443
        %v1817 = vadd.f32 %v1785, %v1447
        %v1818 = vadd.f32 %v1786, %v1449
        %v1819 = vadd.f32 %v1787, %v1453
        %v1820 = vadd.f32 %v1788, %v1455
        %v1821 = vadd.f32 %v1789, %v1459
        %v1822 = vadd.f32 %v1790, %v1461
        %v1823 = vadd.f32 %v1791, %v1465
        %v1824 = vadd.f32 %v1792, %v1467
        %v1825 = vadd.f32 %v1793, %v1471
        %v1826 = vadd.f32 %v1794, %v1473
        %v1827 = vmul.f32 %v1213, %v1763
        %v1828 = vmul.f32 %v1214, %v1764
        %v1829 = vmul.f32 %v1215, %v1765
        %v1830 = vmul.f32 %v1216, %v1766
        %v1831 = vmul.f32 %v1217, %v1767
        %v1832 = vmul.f32 %v1218, %v1768
        %v1833 = vmul.f32 %v1219, %v1769
        %v1834 = vmul.f32 %v1220, %v1770
        %v1835 = vmul.f32 %v1221, %v1771
        %v1836 = vmul.f32 %v1222, %v1772
        %v1837 = vmul.f32 %v1223, %v1773
        %v1838 = vmul.f32 %v1224, %v1774
        %v1839 = vmul.f32 %v1225, %v1775
        %v1840 = vmul.f32 %v1226, %v1776
        %v1841 = vmul.f32 %v1227, %v1777
        %v1842 = vmul.f32 %v1228, %v1778
        %v1843 = vmul.f32 %v1229, %v1779
        %v1844 = vmul.f32 %v1230, %v1780
        %v1845 = vmul.f32 %v1231, %v1781
        %v1846 = vmul.f32 %v1232, %v1782
        %v1847 = vmul.f32 %v1233, %v1783
        %v1848 = vmul.f32 %v1234, %v1784
        %v1849 = vmul.f32 %v1235, %v1785
        %v1850 = vmul.f32 %v1236, %v1786
        %v1851 = vmul.f32 %v1237, %v1787
        %v1852 = vmul.f32 %v1238, %v1788
        %v1853 = vmul.f32 %v1239, %v1789
        %v1854 = vmul.f32 %v1240, %v1790
        %v1855 = vmul.f32 %v1241, %v1791
        %v1856 = vmul.f32 %v1242, %v1792
        %v1857 = vmul.f32 %v1243, %v1793
        %v1858 = vmul.f32 %v1244, %v1794
        %v1859 = vld [vmem:[%s337] sm:$0xff]
        %v1860 = vld [vmem:[%s337 + $0x8] sm:$0xff]
        %v1861 = vld [vmem:[%s337 + $0x10] sm:$0xff]
        %v1862 = vld [vmem:[%s337 + $0x18] sm:$0xff]
        %v1863 = vld [vmem:[%s337 + $0x20] sm:$0xff]
        %v1864 = vld [vmem:[%s337 + $0x28] sm:$0xff]
        %v1865 = vld [vmem:[%s337 + $0x30] sm:$0xff]
        %v1866 = vld [vmem:[%s337 + $0x38] sm:$0xff]
        %v1867 = vld [vmem:[%s337 + $0x40] sm:$0xff]
        %v1868 = vld [vmem:[%s337 + $0x48] sm:$0xff]
        %v1869 = vld [vmem:[%s337 + $0x50] sm:$0xff]
        %v1870 = vld [vmem:[%s337 + $0x58] sm:$0xff]
        %v1871 = vld [vmem:[%s337 + $0x60] sm:$0xff]
        %v1872 = vld [vmem:[%s337 + $0x68] sm:$0xff]
        %v1873 = vld [vmem:[%s337 + $0x70] sm:$0xff]
        %v1874 = vld [vmem:[%s337 + $0x78] sm:$0xff]
        %v1875 = vunpack.c.l.bf16 %v1859
        %v1876 = vunpack.c.h.bf16 %v1859
        %v1877 = vunpack.c.l.bf16 %v1860
        %v1878 = vunpack.c.h.bf16 %v1860
        %v1879 = vunpack.c.l.bf16 %v1861
        %v1880 = vunpack.c.h.bf16 %v1861
        %v1881 = vunpack.c.l.bf16 %v1862
        %v1882 = vunpack.c.h.bf16 %v1862
        %v1883 = vunpack.c.l.bf16 %v1863
        %v1884 = vunpack.c.h.bf16 %v1863
        %v1885 = vunpack.c.l.bf16 %v1864
        %v1886 = vunpack.c.h.bf16 %v1864
        %v1887 = vunpack.c.l.bf16 %v1865
        %v1888 = vunpack.c.h.bf16 %v1865
        %v1889 = vunpack.c.l.bf16 %v1866
        %v1890 = vunpack.c.h.bf16 %v1866
        %v1891 = vunpack.c.l.bf16 %v1867
        %v1892 = vunpack.c.h.bf16 %v1867
        %v1893 = vunpack.c.l.bf16 %v1868
        %v1894 = vunpack.c.h.bf16 %v1868
        %v1895 = vunpack.c.l.bf16 %v1869
        %v1896 = vunpack.c.h.bf16 %v1869
        %v1897 = vunpack.c.l.bf16 %v1870
        %v1898 = vunpack.c.h.bf16 %v1870
        %v1899 = vunpack.c.l.bf16 %v1871
        %v1900 = vunpack.c.h.bf16 %v1871
        %v1901 = vunpack.c.l.bf16 %v1872
        %v1902 = vunpack.c.h.bf16 %v1872
        %v1903 = vunpack.c.l.bf16 %v1873
        %v1904 = vunpack.c.h.bf16 %v1873
        %v1905 = vunpack.c.l.bf16 %v1874
        %v1906 = vunpack.c.h.bf16 %v1874
        %v1907 = vmul.f32 %v1875, %v1795
        %v1908 = vmul.f32 %v1876, %v1796
        %v1909 = vmul.f32 %v1877, %v1797
        %v1910 = vmul.f32 %v1878, %v1798
        %v1911 = vmul.f32 %v1879, %v1799
        %v1912 = vmul.f32 %v1880, %v1800
        %v1913 = vmul.f32 %v1881, %v1801
        %v1914 = vmul.f32 %v1882, %v1802
        %v1915 = vmul.f32 %v1883, %v1803
        %v1916 = vmul.f32 %v1884, %v1804
        %v1917 = vmul.f32 %v1885, %v1805
        %v1918 = vmul.f32 %v1886, %v1806
        %v1919 = vmul.f32 %v1887, %v1807
        %v1920 = vmul.f32 %v1888, %v1808
        %v1921 = vmul.f32 %v1889, %v1809
        %v1922 = vmul.f32 %v1890, %v1810
        %v1923 = vmul.f32 %v1891, %v1811
        %v1924 = vmul.f32 %v1892, %v1812
        %v1925 = vmul.f32 %v1893, %v1813
        %v1926 = vmul.f32 %v1894, %v1814
        %v1927 = vmul.f32 %v1895, %v1815
        %v1928 = vmul.f32 %v1896, %v1816
        %v1929 = vmul.f32 %v1897, %v1817
        %v1930 = vmul.f32 %v1898, %v1818
        %v1931 = vmul.f32 %v1899, %v1819
        %v1932 = vmul.f32 %v1900, %v1820
        %v1933 = vmul.f32 %v1901, %v1821
        %v1934 = vmul.f32 %v1902, %v1822
        %v1935 = vmul.f32 %v1903, %v1823
        %v1936 = vmul.f32 %v1904, %v1824
        %v1937 = vmul.f32 %v1905, %v1825
        %v1938 = vmul.f32 %v1906, %v1826
        %v1939 = vadd.f32 %v1827, %v1907
        %v1940 = vadd.f32 %v1828, %v1908
        %v1941 = vadd.f32 %v1829, %v1909
        %v1942 = vadd.f32 %v1830, %v1910
        %v1943 = vadd.f32 %v1831, %v1911
        %v1944 = vadd.f32 %v1832, %v1912
        %v1945 = vadd.f32 %v1833, %v1913
        %v1946 = vadd.f32 %v1834, %v1914
        %v1947 = vadd.f32 %v1835, %v1915
        %v1948 = vadd.f32 %v1836, %v1916
        %v1949 = vadd.f32 %v1837, %v1917
        %v1950 = vadd.f32 %v1838, %v1918
        %v1951 = vadd.f32 %v1839, %v1919
        %v1952 = vadd.f32 %v1840, %v1920
        %v1953 = vadd.f32 %v1841, %v1921
        %v1954 = vadd.f32 %v1842, %v1922
        %v1955 = vadd.f32 %v1843, %v1923
        %v1956 = vadd.f32 %v1844, %v1924
        %v1957 = vadd.f32 %v1845, %v1925
        %v1958 = vadd.f32 %v1846, %v1926
        %v1959 = vadd.f32 %v1847, %v1927
        %v1960 = vadd.f32 %v1848, %v1928
        %v1961 = vadd.f32 %v1849, %v1929
        %v1962 = vadd.f32 %v1850, %v1930
        %v1963 = vadd.f32 %v1851, %v1931
        %v1964 = vadd.f32 %v1852, %v1932
        %v1965 = vadd.f32 %v1853, %v1933
        %v1966 = vadd.f32 %v1854, %v1934
        %v1967 = vadd.f32 %v1855, %v1935
        %v1968 = vadd.f32 %v1856, %v1936
        %v1969 = vadd.f32 %v1857, %v1937
        %v1970 = vadd.f32 %v1858, %v1938
        %v1971 = vand.u32 2147483647, %v1939
        %v1972 = vand.u32 2147483647, %v1940
        %v1973 = vand.u32 2147483647, %v1941
        %v1974 = vand.u32 2147483647, %v1942
        %v1975 = vand.u32 2147483647, %v1943
        %v1976 = vand.u32 2147483647, %v1944
        %v1977 = vand.u32 2147483647, %v1945
        %v1978 = vand.u32 2147483647, %v1946
        %v1979 = vand.u32 2147483647, %v1947
        %v1980 = vand.u32 2147483647, %v1948
        %v1981 = vand.u32 2147483647, %v1949
        %v1982 = vand.u32 2147483647, %v1950
        %v1983 = vand.u32 2147483647, %v1951
        %v1984 = vand.u32 2147483647, %v1952
        %v1985 = vand.u32 2147483647, %v1953
        %v1986 = vand.u32 2147483647, %v1954
        %v1987 = vand.u32 2147483647, %v1955
        %v1988 = vand.u32 2147483647, %v1956
        %v1989 = vand.u32 2147483647, %v1957
        %v1990 = vand.u32 2147483647, %v1958
        %v1991 = vand.u32 2147483647, %v1959
        %v1992 = vand.u32 2147483647, %v1960
        %v1993 = vand.u32 2147483647, %v1961
        %v1994 = vand.u32 2147483647, %v1962
        %v1995 = vand.u32 2147483647, %v1963
        %v1996 = vand.u32 2147483647, %v1964
        %v1997 = vand.u32 2147483647, %v1965
        %v1998 = vand.u32 2147483647, %v1966
        %v1999 = vand.u32 2147483647, %v1967
        %v2000 = vand.u32 2147483647, %v1968
        %v2001 = vand.u32 2147483647, %v1969
        %v2002 = vand.u32 2147483647, %v1970
        %v2003 = vadd.f32 %v1971, %v1973
        %v2004 = vadd.f32 %v2003, %v1975
        %v2005 = vadd.f32 %v2004, %v1977
        %v2006 = vadd.f32 %v2005, %v1979
        %v2007 = vadd.f32 %v2006, %v1981
        %v2008 = vadd.f32 %v2007, %v1983
        %v2009 = vadd.f32 %v2008, %v1985
        %v2010 = vadd.f32 %v2009, %v1987
        %v2011 = vadd.f32 %v2010, %v1989
        %v2012 = vadd.f32 %v2011, %v1991
        %v2013 = vadd.f32 %v2012, %v1993
        %v2014 = vadd.f32 %v2013, %v1995
        %v2015 = vadd.f32 %v2014, %v1997
        %v2016 = vadd.f32 %v2015, %v1999
        %v2017 = vadd.f32 %v2016, %v2001
        %v2018 = vadd.f32 %v1972, %v1974
        %v2019 = vadd.f32 %v2018, %v1976
        %v2020 = vadd.f32 %v2019, %v1978
        %v2021 = vadd.f32 %v2020, %v1980
        %v2022 = vadd.f32 %v2021, %v1982
        %v2023 = vadd.f32 %v2022, %v1984
        %v2024 = vadd.f32 %v2023, %v1986
        %v2025 = vadd.f32 %v2024, %v1988
        %v2026 = vadd.f32 %v2025, %v1990
        %v2027 = vadd.f32 %v2026, %v1992
        %v2028 = vadd.f32 %v2027, %v1994
        %v2029 = vadd.f32 %v2028, %v1996
        %v2030 = vadd.f32 %v2029, %v1998
        %v2031 = vadd.f32 %v2030, %v2000
        %v2032 = vadd.f32 %v2031, %v2002
        %v2033 = vld [vmem:[#allocation2] sm:$0xff]
        %v2034 = vld [vmem:[#allocation2 + $0x8] sm:$0xff]
        %v2035 = vadd.f32 %v2033, %v2017
        %v2036 = vadd.f32 %v2034, %v2032
        %2037 = vst [vmem:[#allocation2] sm:$0xff] %v2035
        %2038 = vst [vmem:[#allocation2 + $0x8] sm:$0xff] %v2036
        // Predicated region
        $region45: #{tpu_custom_call.1} parent=35 // pred_check
          %p2039 = pneg %p352
        $region46: #{tpu_custom_call.1} parent=35 // pred_check_branch
          %2041 = sbr.rel (%p2039) target = $region48
        $region47: #{tpu_custom_call.1} parent=35 // pred_region
          %v2042 = vld [vmem:[#allocation2] sm:$0xff]
          %v2043 = vld [vmem:[#allocation2 + $0x8] sm:$0xff]
          %v2044 = vadd.f32 %v2042, %v2043
          %2045 = vadd.xlane.f32.xlu0 %v2044
          %v2046 = vpop.xlane.xlu0 %2045
          %v2047 = vrot.slane %v2046, 4
          %v2048 = vadd.f32 %v2046, %v2047
          %v2049 = vrot.slane %v2048, 2
          %v2050 = vadd.f32 %v2048, %v2049
          %v2051 = vrot.slane %v2050, 1
          %v2052 = vadd.f32 %v2050, %v2051
          %s2053 = vtos %v2052
          %v2054 = vstv %s2053
          %2055 = vst [vmem:[%s325] sm:$0xff] %v2054
        $region48: #{tpu_custom_call.1} parent=35 // pred_fallthru
          _
        %s2056 = sand.u32 %s156, 1
        %s2057 = scalar_lea.sflag [#allocation7], %s2056
        %s2058 = sand.u32 %s156, 1
        %s2059 = smul.addr %s2058, 8
        %s2060 = scalar_lea.vmem [#allocation8], %s2059
        // Predicated region
        $region49: #{tpu_custom_call.1} parent=35 // pred_check
          %p2061 = pneg %p166
        $region50: #{tpu_custom_call.1} parent=35 // pred_check_branch
          %2063 = sbr.rel (%p2061) target = $region52
        $region51: #{tpu_custom_call.1} parent=35 // pred_region
          %s2065 = ssub.s32 128, 128
          %2066 = vsyncadd %s2057, %s2065
          %s2067 = smul.addr %s32, 128
          %s2068 = scalar_lea.hbm %s5, %s2067
          %s2070 = sshll.u32 %s2060, 4
          %s2071 = int_to_ptr.vmem [resolvable:$true] %s2070
          %2073 = dma.vmem_to_hbm [thread:$0]  %s2071, 128, %s2068, %s2057
        $region52: #{tpu_custom_call.1} parent=35 // pred_fallthru
          _
      $region36: #{tpu_custom_call.1} parent=5 // pred_fallthru
        _
      %p2074 = scmp.le.s32.totalorder 2, %s23
      // Predicated region
      $region53: #{tpu_custom_call.1} parent=5 // pred_check
        %p2075 = pneg %p2074
      $region54: #{tpu_custom_call.1} parent=5 // pred_check_branch
        %2077 = sbr.rel (%p2075) target = $region56
      $region55: #{tpu_custom_call.1} parent=5 // pred_region
        %s2078 = ssub.s32 %s23, 2
        // Predicated region
        $region57: #{tpu_custom_call.1} parent=55 // pred_check
          %p2079 = pneg %p172
        $region58: #{tpu_custom_call.1} parent=55 // pred_check_branch
          %2081 = sbr.rel (%p2079) target = $region60
        $region59: #{tpu_custom_call.1} parent=55 // pred_region
          %s2082 = sand.u32 %s157, 1
          %s2083 = scalar_lea.sflag [#allocation7], %s2082
          %s2084 = sand.u32 %s157, 1
          %s2085 = smul.addr %s2084, 8
          %s2086 = scalar_lea.vmem [#allocation8], %s2085
          %2087 = dma.done %s2083, 128
        $region60: #{tpu_custom_call.1} parent=55 // pred_fallthru
          _
      $region56: #{tpu_custom_call.1} parent=5 // pred_fallthru
        _
    $region6: #{tpu_custom_call.1} parent=1 // loop_footer
      %s27 = sadd.s32 1, %s23
    $region7: #{tpu_custom_call.1} parent=1 // loop_footer_branch
      %22 = sbr.rel target = $region3
    $region8: #{tpu_custom_call.1} parent=1 // loop_exit
      _
    %2088 = vsyncpa [#allocation6], 1
    %s2089 = scalar_lea.sflag [#allocation6], 1
    %2090 = vsyncpa %s2089, 1
    %2091 = vsyncpa [#allocation7], 1
    %s2092 = scalar_lea.sflag [#allocation7], 1
    %2093 = vsyncpa %s2092, 1

</llo_original>
